<compile_context>
chip_gen: v7x
topology: tpu7x:2x2x1
jax: 0.10.0
libtpu: 0.0.40
codegen_flags: <defaults>
</compile_context>

<pallas_src>
import functools

import jax
import jax.numpy as jnp
from jax import lax
from jax.experimental import pallas as pl
from jax.experimental.pallas import tpu as pltpu

EPS = 1e-5


# ------------------------------ Pallas kernel --------------------------------

def _bottleneck_kernel(x_ref, w1_ref, w2_ref, w3_ref, wd_ref, s_ref,
                       b1_ref, b2_ref, b3d_ref, o_ref):
    # x_ref : (1, H, W*Cin)  bf16, row-interleaved NHWC
    # w1_ref: (W*Cin, Wp*WIDTH)        conv1 folded+W-padded block weight
    # w2_ref: (3, Wp*WIDTH, Wo*WIDTH)  conv2 per-ky block weights (kx+stride folded)
    # w3_ref: (Wo*WIDTH, Wo*COUT)      conv3 folded block weight
    # wd_ref: (W*Cin, Wo*COUT)         downsample folded block weight (or identity)
    # s_ref : (3, Ho, H)   bf16 0/1 row-tap selectors (ky - 1 shift + row stride)
    # b1/b2/b3d: (1, .) f32 folded biases (b3d = bn3 bias + downsample-bn bias)
    x = x_ref[0]                                                      # (H, W*Cin)

    # ---- conv1 (1x1) + bn1 + relu (spatial W zero-padding folded into W1) ----
    h1 = jnp.dot(x, w1_ref[...], preferred_element_type=jnp.float32)  # (H, Wp*WIDTH)
    h1 = jnp.maximum(h1 + b1_ref[...], 0.0).astype(jnp.bfloat16)

    # ---- conv2 (3x3, stride, pad=1) + bn2 + relu: three row-tap matmuls -----
    acc = None
    for ky in range(3):
        rows = jnp.dot(s_ref[ky], h1,
                       preferred_element_type=jnp.float32)            # (Ho, Wp*WIDTH)
        part = jnp.dot(rows.astype(jnp.bfloat16), w2_ref[ky],
                       preferred_element_type=jnp.float32)            # (Ho, Wo*WIDTH)
        acc = part if acc is None else acc + part
    h2 = jnp.maximum(acc + b2_ref[...], 0.0).astype(jnp.bfloat16)

    # ---- conv3+bn3, downsample+bn, skip-add, final relu (all fused) ---------
    y = jnp.dot(h2, w3_ref[...], preferred_element_type=jnp.float32)  # (Ho, Wo*COUT)
    xs = jnp.dot(s_ref[1], x, preferred_element_type=jnp.float32)     # rows at stride
    y = y + jnp.dot(xs.astype(jnp.bfloat16), wd_ref[...],
                    preferred_element_type=jnp.float32)
    o_ref[0] = jnp.maximum(y + b3d_ref[...], 0.0).astype(o_ref.dtype)


# --------------------------- wrapper / weight prep ---------------------------

def fold_bn(bn):
    gamma, beta, mean, var = bn
    scale = gamma / jnp.sqrt(var + EPS)
    bias = beta - mean * scale
    return scale, bias


def _prep_params(params, H, W, cin, stride):
    width = params["conv1_w"].shape[0]
    cout = params["conv3_w"].shape[0]
    Wp = W + 2
    Ho = (H - 1) // stride + 1
    Wo = (W - 1) // stride + 1
    f32 = jnp.float32

    s1, b1 = fold_bn(params["bn1"])
    s2, b2 = fold_bn(params["bn2"])
    s3, b3 = fold_bn(params["bn3"])

    # conv1: (width,cin,1,1) OIHW -> (cin,width), BN scale folded in; block-diag
    # over W positions, shifted by +1 so the output already has zero W-pad blocks.
    w1f = params["conv1_w"].reshape(width, cin).T * s1[None, :]
    shift1 = jnp.eye(W, Wp, k=1, dtype=f32)                 # [w, w+1] = 1
    W1 = jnp.kron(shift1, w1f)                              # (W*cin, Wp*width)
    B1 = jnp.pad(jnp.tile(b1, W), (width, width)).reshape(1, Wp * width)

    # conv2: per-ky block weight with the kx shift and the column stride folded in.
    W2ks = []
    for ky in range(3):
        m = jnp.zeros((Wp * width, Wo * width), f32)
        for kx in range(3):
            w2f = params["conv2_w"][:, :, ky, kx].T * s2[None, :]        # (ci, co)
            sel = (jnp.arange(Wp)[:, None] ==
                   stride * jnp.arange(Wo)[None, :] + kx).astype(f32)    # (Wp, Wo)
            m = m + jnp.kron(sel, w2f)
        W2ks.append(m)
    W2 = jnp.stack(W2ks)                                    # (3, Wp*width, Wo*width)
    B2 = jnp.tile(b2, Wo).reshape(1, Wo * width)

    # conv3: (cout,width,1,1) -> block-diag over Wo output positions.
    w3f = params["conv3_w"].reshape(cout, width).T * s3[None, :]
    W3 = jnp.kron(jnp.eye(Wo, dtype=f32), w3f)              # (Wo*width, Wo*cout)
    B3 = jnp.tile(b3, Wo)

    # downsample (1x1 strided conv + bn) or identity skip.
    if params.get("ds_w") is not None:
        sd, bd = fold_bn(params["ds_bn"])
        wdf = params["ds_w"].reshape(cout, cin).T * sd[None, :]          # (cin, cout)
        BD = jnp.tile(bd, Wo)
    else:
        assert stride == 1 and cin == cout, \
            "identity skip requires stride==1 and cin==cout"
        wdf = jnp.eye(cin, dtype=f32)
        BD = jnp.zeros(Wo * cout, f32)
    seld = (jnp.arange(W)[:, None] ==
            stride * jnp.arange(Wo)[None, :]).astype(f32)   # (W, Wo), column stride
    WD = jnp.kron(seld, wdf)                                # (W*cin, Wo*cout)
    B3D = (B3 + BD).reshape(1, Wo * cout)                   # bn3 + ds-bn bias fused

    # row-tap selectors: S[ky, oh, r] = 1 iff r == stride*oh + ky - 1 (H-pad -> 0 row)
    r = jnp.arange(H)[None, None, :]
    oh = jnp.arange(Ho)[None, :, None]
    kyv = jnp.arange(3)[:, None, None]
    S = (r == stride * oh + kyv - 1).astype(f32)            # (3, Ho, H)

    bf = lambda a: a.astype(jnp.bfloat16)
    return dict(W1=bf(W1), W2=bf(W2), W3=bf(W3), WD=bf(WD), S=bf(S),
                B1=B1.astype(f32), B2=B2.astype(f32), B3D=B3D.astype(f32),
                dims=(Ho, Wo, width, cout))


@functools.partial(jax.jit, static_argnums=(2,))
def bottleneck_forward(x_nchw, params, stride):
    N, cin, H, W = x_nchw.shape
    prep = _prep_params(params, H, W, cin, stride)
    Ho, Wo, width, cout = prep["dims"]

    # NCHW -> row-interleaved (N, H, W*Cin), bf16 for the MXU.
    x_rows = jnp.transpose(x_nchw, (0, 2, 3, 1)).reshape(N, H, W * cin)
    x_rows = x_rows.astype(jnp.bfloat16)

    out = pl.pallas_call(
        _bottleneck_kernel,
        out_shape=jax.ShapeDtypeStruct((N, Ho, Wo * cout), jnp.float32),
        grid=(N,),
        in_specs=[
            pl.BlockSpec((1, H, W * cin), lambda b: (b, 0, 0)),
            pl.BlockSpec(prep["W1"].shape, lambda b: (0, 0)),
            pl.BlockSpec(prep["W2"].shape, lambda b: (0, 0, 0)),
            pl.BlockSpec(prep["W3"].shape, lambda b: (0, 0)),
            pl.BlockSpec(prep["WD"].shape, lambda b: (0, 0)),
            pl.BlockSpec(prep["S"].shape, lambda b: (0, 0, 0)),
            pl.BlockSpec(prep["B1"].shape, lambda b: (0, 0)),
            pl.BlockSpec(prep["B2"].shape, lambda b: (0, 0)),
            pl.BlockSpec(prep["B3D"].shape, lambda b: (0, 0)),
        ],
        out_specs=pl.BlockSpec((1, Ho, Wo * cout), lambda b: (b, 0, 0)),
        compiler_params=pltpu.CompilerParams(dimension_semantics=("parallel",)),
    )(x_rows, prep["W1"], prep["W2"], prep["W3"], prep["WD"], prep["S"],
      prep["B1"], prep["B2"], prep["B3D"])

    out = out.reshape(N, Ho, Wo, cout)
    return jnp.transpose(out, (0, 3, 1, 2))                 # back to NCHW


# --------------------------- reference (pure JAX) -----------------------------

def ref_forward(x, params, stride):
    def bn(y, p):
        g, b, m, v = p
        inv = 1.0 / jnp.sqrt(v + EPS)
        return (y - m[None, :, None, None]) * inv[None, :, None, None] * \
               g[None, :, None, None] + b[None, :, None, None]

    def conv(y, w, s=1, p=0):
        return lax.conv_general_dilated(
            y, w, (s, s), [(p, p), (p, p)],
            dimension_numbers=("NCHW", "OIHW", "NCHW"))

    out = jax.nn.relu(bn(conv(x, params["conv1_w"]), params["bn1"]))
    out = jax.nn.relu(bn(conv(out, params["conv2_w"], s=stride, p=1), params["bn2"]))
    out = bn(conv(out, params["conv3_w"]), params["bn3"])
    identity = x
    if params.get("ds_w") is not None:
        identity = bn(conv(x, params["ds_w"], s=stride), params["ds_bn"])
    return jax.nn.relu(out + identity)


# --------------------------- setup & run --------------------------------------

def make_params(key, cin, width, cout):
    ks = jax.random.split(key, 16)

    def bn_params(k, c):
        k1, k2, k3, k4 = jax.random.split(k, 4)
        gamma = 1.0 + 0.1 * jax.random.normal(k1, (c,), jnp.float32)
        beta = 0.1 * jax.random.normal(k2, (c,), jnp.float32)
        mean = 0.1 * jax.random.normal(k3, (c,), jnp.float32)
        var = jax.random.uniform(k4, (c,), jnp.float32, 0.5, 1.5)
        return (gamma, beta, mean, var)

    return {
        "conv1_w": 0.1 * jax.random.normal(ks[0], (width, cin, 1, 1), jnp.float32),
        "bn1": bn_params(ks[1], width),
        "conv2_w": 0.1 * jax.random.normal(ks[2], (width, width, 3, 3), jnp.float32),
        "bn2": bn_params(ks[3], width),
        "conv3_w": 0.1 * jax.random.normal(ks[4], (cout, width, 1, 1), jnp.float32),
        "bn3": bn_params(ks[5], cout),
        "ds_w": 0.1 * jax.random.normal(ks[6], (cout, cin, 1, 1), jnp.float32),
        "ds_bn": bn_params(ks[7], cout),
    }


if __name__ == "__main__":
    key = jax.random.PRNGKey(0)
    kx, kp = jax.random.split(key)

    # bottleneck config: in=16 channels, width(planes)=8, expansion 4 -> out=32,
    # stride=2 with a downsample branch (1x1 stride-2 conv + bn).
    N, CIN, H, W = 2, 16, 16, 16
    WIDTH, COUT, STRIDE = 8, 32, 2

    x = jax.random.normal(kx, (N, CIN, H, W), jnp.float32)   # NCHW like PyTorch
    params = make_params(kp, CIN, WIDTH, COUT)

    out = jax.block_until_ready(bottleneck_forward(x, params, STRIDE))
    ref = jax.block_until_ready(ref_forward(x, params, STRIDE))

    assert out.shape == (N, COUT, H // STRIDE, W // STRIDE), out.shape
    # bf16 MXU operands -> looser tolerance than a pure-f32 path.
    max_err = float(jnp.max(jnp.abs(out - ref)))
    assert max_err < 5e-2, max_err

    # TODO(synk): nn.quantized.FloatFunctional observers / quant stubs are not
    # modeled; this is the float eval-mode forward (skip_add == plain add).
    print("KERNEL_OK")
</pallas_src>

<mosaic_0001>
module attributes {stable_mosaic.version = 11 : i64} {
  func.func @_bottleneck_kernel(%arg0: i32, %arg1: memref<1x16x256xbf16, #tpu.memory_space<vmem>>, %arg2: memref<256x144xbf16, #tpu.memory_space<vmem>>, %arg3: memref<3x144x64xbf16, #tpu.memory_space<vmem>>, %arg4: memref<64x256xbf16, #tpu.memory_space<vmem>>, %arg5: memref<256x256xbf16, #tpu.memory_space<vmem>>, %arg6: memref<3x8x16xbf16, #tpu.memory_space<vmem>>, %arg7: memref<1x144xf32, #tpu.memory_space<vmem>>, %arg8: memref<1x64xf32, #tpu.memory_space<vmem>>, %arg9: memref<1x256xf32, #tpu.memory_space<vmem>>, %arg10: memref<1x8x256xf32, #tpu.memory_space<vmem>>) attributes {dimension_semantics = [#tpu.dimension_semantics<parallel>], iteration_bounds = array<i64: 2>, scalar_prefetch = 0 : i64, scratch_operands = 0 : i64, tpu.core_type = #tpu.core_type<tc>, window_params = [{transform_indices = @transform_0, window_bounds = array<i64: 1, 16, 256>}, {pipeline_mode = #tpu.pipeline_mode<synchronous>, transform_indices = @transform_1, window_bounds = array<i64: 256, 144>}, {pipeline_mode = #tpu.pipeline_mode<synchronous>, transform_indices = @transform_2, window_bounds = array<i64: 3, 144, 64>}, {pipeline_mode = #tpu.pipeline_mode<synchronous>, transform_indices = @transform_3, window_bounds = array<i64: 64, 256>}, {pipeline_mode = #tpu.pipeline_mode<synchronous>, transform_indices = @transform_4, window_bounds = array<i64: 256, 256>}, {pipeline_mode = #tpu.pipeline_mode<synchronous>, transform_indices = @transform_5, window_bounds = array<i64: 3, 8, 16>}, {pipeline_mode = #tpu.pipeline_mode<synchronous>, transform_indices = @transform_6, window_bounds = array<i64: 1, 144>}, {pipeline_mode = #tpu.pipeline_mode<synchronous>, transform_indices = @transform_7, window_bounds = array<i64: 1, 64>}, {pipeline_mode = #tpu.pipeline_mode<synchronous>, transform_indices = @transform_8, window_bounds = array<i64: 1, 256>}, {transform_indices = @transform_9, window_bounds = array<i64: 1, 8, 256>}]} {
    %c0 = arith.constant 0 : index
    %c0_0 = arith.constant 0 : index
    %c0_1 = arith.constant 0 : index
    %0 = vector.load %arg1[%c0, %c0_0, %c0_1] : memref<1x16x256xbf16, #tpu.memory_space<vmem>>, vector<1x16x256xbf16>
    %1 = vector.shape_cast %0 : vector<1x16x256xbf16> to vector<16x256xbf16>
    %c0_2 = arith.constant 0 : index
    %c0_3 = arith.constant 0 : index
    %2 = vector.load %arg2[%c0_2, %c0_3] : memref<256x144xbf16, #tpu.memory_space<vmem>>, vector<256x144xbf16>
    %cst = arith.constant dense<0.000000e+00> : vector<16x144xf32>
    %3 = tpu.matmul %1, %2, %cst {dimension_numbers = #tpu.dot_dimension_numbers<[1], [0], [0], [1], [0, 0, 1, 1], [], []>} : vector<16x256xbf16>, vector<256x144xbf16>, vector<16x144xf32> -> vector<16x144xf32>
    %c0_4 = arith.constant 0 : index
    %c0_5 = arith.constant 0 : index
    %4 = vector.load %arg7[%c0_4, %c0_5] : memref<1x144xf32, #tpu.memory_space<vmem>>, vector<1x144xf32>
    %5 = vector.broadcast %4 : vector<1x144xf32> to vector<16x144xf32>
    %6 = arith.addf %3, %5 : vector<16x144xf32>
    %cst_6 = arith.constant 0.000000e+00 : f32
    %7 = vector.broadcast %cst_6 : f32 to vector<16x144xf32>
    %8 = arith.maximumf %6, %7 : vector<16x144xf32>
    %9 = arith.truncf %8 : vector<16x144xf32> to vector<16x144xbf16>
    %c0_7 = arith.constant 0 : index
    %c0_8 = arith.constant 0 : index
    %c0_9 = arith.constant 0 : index
    %10 = vector.load %arg6[%c0_7, %c0_8, %c0_9] : memref<3x8x16xbf16, #tpu.memory_space<vmem>>, vector<1x8x16xbf16>
    %11 = vector.shape_cast %10 : vector<1x8x16xbf16> to vector<8x16xbf16>
    %cst_10 = arith.constant dense<0.000000e+00> : vector<8x144xf32>
    %12 = tpu.matmul %11, %9, %cst_10 {dimension_numbers = #tpu.dot_dimension_numbers<[1], [0], [0], [1], [0, 0, 1, 1], [], []>} : vector<8x16xbf16>, vector<16x144xbf16>, vector<8x144xf32> -> vector<8x144xf32>
    %13 = arith.truncf %12 : vector<8x144xf32> to vector<8x144xbf16>
    %c0_11 = arith.constant 0 : index
    %c0_12 = arith.constant 0 : index
    %c0_13 = arith.constant 0 : index
    %14 = vector.load %arg3[%c0_11, %c0_12, %c0_13] : memref<3x144x64xbf16, #tpu.memory_space<vmem>>, vector<1x144x64xbf16>
    %15 = vector.shape_cast %14 : vector<1x144x64xbf16> to vector<144x64xbf16>
    %cst_14 = arith.constant dense<0.000000e+00> : vector<8x64xf32>
    %16 = tpu.matmul %13, %15, %cst_14 {dimension_numbers = #tpu.dot_dimension_numbers<[1], [0], [0], [1], [0, 0, 1, 1], [], []>} : vector<8x144xbf16>, vector<144x64xbf16>, vector<8x64xf32> -> vector<8x64xf32>
    %c1 = arith.constant 1 : index
    %c0_15 = arith.constant 0 : index
    %c0_16 = arith.constant 0 : index
    %17 = vector.load %arg6[%c1, %c0_15, %c0_16] : memref<3x8x16xbf16, #tpu.memory_space<vmem>>, vector<1x8x16xbf16>
    %18 = vector.shape_cast %17 : vector<1x8x16xbf16> to vector<8x16xbf16>
    %cst_17 = arith.constant dense<0.000000e+00> : vector<8x144xf32>
    %19 = tpu.matmul %18, %9, %cst_17 {dimension_numbers = #tpu.dot_dimension_numbers<[1], [0], [0], [1], [0, 0, 1, 1], [], []>} : vector<8x16xbf16>, vector<16x144xbf16>, vector<8x144xf32> -> vector<8x144xf32>
    %20 = arith.truncf %19 : vector<8x144xf32> to vector<8x144xbf16>
    %c1_18 = arith.constant 1 : index
    %c0_19 = arith.constant 0 : index
    %c0_20 = arith.constant 0 : index
    %21 = vector.load %arg3[%c1_18, %c0_19, %c0_20] : memref<3x144x64xbf16, #tpu.memory_space<vmem>>, vector<1x144x64xbf16>
    %22 = vector.shape_cast %21 : vector<1x144x64xbf16> to vector<144x64xbf16>
    %cst_21 = arith.constant dense<0.000000e+00> : vector<8x64xf32>
    %23 = tpu.matmul %20, %22, %cst_21 {dimension_numbers = #tpu.dot_dimension_numbers<[1], [0], [0], [1], [0, 0, 1, 1], [], []>} : vector<8x144xbf16>, vector<144x64xbf16>, vector<8x64xf32> -> vector<8x64xf32>
    %24 = arith.addf %16, %23 : vector<8x64xf32>
    %c2 = arith.constant 2 : index
    %c0_22 = arith.constant 0 : index
    %c0_23 = arith.constant 0 : index
    %25 = vector.load %arg6[%c2, %c0_22, %c0_23] : memref<3x8x16xbf16, #tpu.memory_space<vmem>>, vector<1x8x16xbf16>
    %26 = vector.shape_cast %25 : vector<1x8x16xbf16> to vector<8x16xbf16>
    %cst_24 = arith.constant dense<0.000000e+00> : vector<8x144xf32>
    %27 = tpu.matmul %26, %9, %cst_24 {dimension_numbers = #tpu.dot_dimension_numbers<[1], [0], [0], [1], [0, 0, 1, 1], [], []>} : vector<8x16xbf16>, vector<16x144xbf16>, vector<8x144xf32> -> vector<8x144xf32>
    %28 = arith.truncf %27 : vector<8x144xf32> to vector<8x144xbf16>
    %c2_25 = arith.constant 2 : index
    %c0_26 = arith.constant 0 : index
    %c0_27 = arith.constant 0 : index
    %29 = vector.load %arg3[%c2_25, %c0_26, %c0_27] : memref<3x144x64xbf16, #tpu.memory_space<vmem>>, vector<1x144x64xbf16>
    %30 = vector.shape_cast %29 : vector<1x144x64xbf16> to vector<144x64xbf16>
    %cst_28 = arith.constant dense<0.000000e+00> : vector<8x64xf32>
    %31 = tpu.matmul %28, %30, %cst_28 {dimension_numbers = #tpu.dot_dimension_numbers<[1], [0], [0], [1], [0, 0, 1, 1], [], []>} : vector<8x144xbf16>, vector<144x64xbf16>, vector<8x64xf32> -> vector<8x64xf32>
    %32 = arith.addf %24, %31 : vector<8x64xf32>
    %c0_29 = arith.constant 0 : index
    %c0_30 = arith.constant 0 : index
    %33 = vector.load %arg8[%c0_29, %c0_30] : memref<1x64xf32, #tpu.memory_space<vmem>>, vector<1x64xf32>
    %34 = vector.broadcast %33 : vector<1x64xf32> to vector<8x64xf32>
    %35 = arith.addf %32, %34 : vector<8x64xf32>
    %cst_31 = arith.constant 0.000000e+00 : f32
    %36 = vector.broadcast %cst_31 : f32 to vector<8x64xf32>
    %37 = arith.maximumf %35, %36 : vector<8x64xf32>
    %38 = arith.truncf %37 : vector<8x64xf32> to vector<8x64xbf16>
    %c0_32 = arith.constant 0 : index
    %c0_33 = arith.constant 0 : index
    %39 = vector.load %arg4[%c0_32, %c0_33] : memref<64x256xbf16, #tpu.memory_space<vmem>>, vector<64x256xbf16>
    %cst_34 = arith.constant dense<0.000000e+00> : vector<8x256xf32>
    %40 = tpu.matmul %38, %39, %cst_34 {dimension_numbers = #tpu.dot_dimension_numbers<[1], [0], [0], [1], [0, 0, 1, 1], [], []>} : vector<8x64xbf16>, vector<64x256xbf16>, vector<8x256xf32> -> vector<8x256xf32>
    %c1_35 = arith.constant 1 : index
    %c0_36 = arith.constant 0 : index
    %c0_37 = arith.constant 0 : index
    %41 = vector.load %arg6[%c1_35, %c0_36, %c0_37] : memref<3x8x16xbf16, #tpu.memory_space<vmem>>, vector<1x8x16xbf16>
    %42 = vector.shape_cast %41 : vector<1x8x16xbf16> to vector<8x16xbf16>
    %cst_38 = arith.constant dense<0.000000e+00> : vector<8x256xf32>
    %43 = tpu.matmul %42, %1, %cst_38 {dimension_numbers = #tpu.dot_dimension_numbers<[1], [0], [0], [1], [0, 0, 1, 1], [], []>} : vector<8x16xbf16>, vector<16x256xbf16>, vector<8x256xf32> -> vector<8x256xf32>
    %44 = arith.truncf %43 : vector<8x256xf32> to vector<8x256xbf16>
    %c0_39 = arith.constant 0 : index
    %c0_40 = arith.constant 0 : index
    %45 = vector.load %arg5[%c0_39, %c0_40] : memref<256x256xbf16, #tpu.memory_space<vmem>>, vector<256x256xbf16>
    %cst_41 = arith.constant dense<0.000000e+00> : vector<8x256xf32>
    %46 = tpu.matmul %44, %45, %cst_41 {dimension_numbers = #tpu.dot_dimension_numbers<[1], [0], [0], [1], [0, 0, 1, 1], [], []>} : vector<8x256xbf16>, vector<256x256xbf16>, vector<8x256xf32> -> vector<8x256xf32>
    %47 = arith.addf %40, %46 : vector<8x256xf32>
    %c0_42 = arith.constant 0 : index
    %c0_43 = arith.constant 0 : index
    %48 = vector.load %arg9[%c0_42, %c0_43] : memref<1x256xf32, #tpu.memory_space<vmem>>, vector<1x256xf32>
    %49 = vector.broadcast %48 : vector<1x256xf32> to vector<8x256xf32>
    %50 = arith.addf %47, %49 : vector<8x256xf32>
    %cst_44 = arith.constant 0.000000e+00 : f32
    %51 = vector.broadcast %cst_44 : f32 to vector<8x256xf32>
    %52 = arith.maximumf %50, %51 : vector<8x256xf32>
    %c0_45 = arith.constant 0 : index
    %c0_46 = arith.constant 0 : index
    %c0_47 = arith.constant 0 : index
    %53 = vector.load %arg10[%c0_45, %c0_46, %c0_47] : memref<1x8x256xf32, #tpu.memory_space<vmem>>, vector<1x8x256xf32>
    %54 = vector.shape_cast %53 : vector<1x8x256xf32> to vector<8x256xf32>
    %55 = vector.shape_cast %52 : vector<8x256xf32> to vector<1x8x256xf32>
    tpu.vector_store %arg10[%c0_45, %c0_46, %c0_47], %55 {strides = array<i32>} : memref<1x8x256xf32, #tpu.memory_space<vmem>>, vector<1x8x256xf32>,
    return
  }
  func.func @transform_0(%arg0: i32) -> (i32, i32, i32) {
    %c0_i32 = arith.constant 0 : i32
    %c0_i32_0 = arith.constant 0 : i32
    %c0_i32_1 = arith.constant 0 : i32
    return %arg0, %c0_i32, %c0_i32_0 : i32, i32, i32
  }
  func.func @transform_1(%arg0: i32) -> (i32, i32) {
    %c0_i32 = arith.constant 0 : i32
    %c0_i32_0 = arith.constant 0 : i32
    %c0_i32_1 = arith.constant 0 : i32
    return %c0_i32, %c0_i32_0 : i32, i32
  }
  func.func @transform_2(%arg0: i32) -> (i32, i32, i32) {
    %c0_i32 = arith.constant 0 : i32
    %c0_i32_0 = arith.constant 0 : i32
    %c0_i32_1 = arith.constant 0 : i32
    %c0_i32_2 = arith.constant 0 : i32
    return %c0_i32, %c0_i32_0, %c0_i32_1 : i32, i32, i32
  }
  func.func @transform_3(%arg0: i32) -> (i32, i32) {
    %c0_i32 = arith.constant 0 : i32
    %c0_i32_0 = arith.constant 0 : i32
    %c0_i32_1 = arith.constant 0 : i32
    return %c0_i32, %c0_i32_0 : i32, i32
  }
  func.func @transform_4(%arg0: i32) -> (i32, i32) {
    %c0_i32 = arith.constant 0 : i32
    %c0_i32_0 = arith.constant 0 : i32
    %c0_i32_1 = arith.constant 0 : i32
    return %c0_i32, %c0_i32_0 : i32, i32
  }
  func.func @transform_5(%arg0: i32) -> (i32, i32, i32) {
    %c0_i32 = arith.constant 0 : i32
    %c0_i32_0 = arith.constant 0 : i32
    %c0_i32_1 = arith.constant 0 : i32
    %c0_i32_2 = arith.constant 0 : i32
    return %c0_i32, %c0_i32_0, %c0_i32_1 : i32, i32, i32
  }
  func.func @transform_6(%arg0: i32) -> (i32, i32) {
    %c0_i32 = arith.constant 0 : i32
    %c0_i32_0 = arith.constant 0 : i32
    %c0_i32_1 = arith.constant 0 : i32
    return %c0_i32, %c0_i32_0 : i32, i32
  }
  func.func @transform_7(%arg0: i32) -> (i32, i32) {
    %c0_i32 = arith.constant 0 : i32
    %c0_i32_0 = arith.constant 0 : i32
    %c0_i32_1 = arith.constant 0 : i32
    return %c0_i32, %c0_i32_0 : i32, i32
  }
  func.func @transform_8(%arg0: i32) -> (i32, i32) {
    %c0_i32 = arith.constant 0 : i32
    %c0_i32_0 = arith.constant 0 : i32
    %c0_i32_1 = arith.constant 0 : i32
    return %c0_i32, %c0_i32_0 : i32, i32
  }
  func.func @transform_9(%arg0: i32) -> (i32, i32, i32) {
    %c0_i32 = arith.constant 0 : i32
    %c0_i32_0 = arith.constant 0 : i32
    %c0_i32_1 = arith.constant 0 : i32
    return %arg0, %c0_i32, %c0_i32_0 : i32, i32, i32
  }
}

</mosaic_0001>

<llo_original>
// kernel: tile.23
$region0: #{tile.23}
  #allocation0 [shape = 's32[1]{0}', space=sflag, size = 0x4, scoped, tag = 'scoped memory for tile.23']
  %s0 = inlined_call_operand.vmem [shape: f32[8], index: 0, kind: input, shape index: {}]
  %s1 = inlined_call_operand.vmem [shape: f32[16,8], index: 1, kind: output, shape index: {}]
  // Predicated region
  $region2: #{tile.23} parent=0 // pred_check
    _
  $region3: #{tile.23} parent=0 // pred_check_branch
    %3 = sbr.rel (0) target = $region5
  $region4: #{tile.23} parent=0 // pred_region
    _
  $region5: #{tile.23} parent=0 // pred_fallthru
    _
  %v4 = vld [vmem:[%s0] ss:$0 sm:$0xff]
  %5 = vst [vmem:[%s1] sm:$0xff] %v4
  %s6 = scalar_lea.vmem %s1, 8
  %7 = vst [vmem:[%s6] sm:$0xff] %v4

// kernel: tile.24
$region0: #{tile.24}
  %s0 = inlined_call_operand.vmem [shape: f32[16,8], index: 0, kind: input, shape index: {}]
  %s1 = inlined_call_operand.vmem [shape: f32[128], index: 1, kind: output, shape index: {}]
  $region1: #{tile.24} parent=0
    #allocation0 [shape = 'u8[4096]{0}', space=vmem, size = 0x1000, scoped, tag = 'scoped mem for output reshape']
    %v2 = vld [vmem:[%s0] sm:$0x1]
    %vm3 = vcmask 64512
    %4 = vst.msk [vmem:[#allocation0] sm:$0x1] %vm3, %v2
    %s5 = scalar_lea.vmem %s0, 15
    %v6 = vld [vmem:[%s5] sm:$0x1]
    %7 = vrot.lane.b32.xlu0 %v6, 120
    %v8 = vpop.permute.xlu0 %7
    %vm9 = vcmask 1048512
    %10 = vst.msk [vmem:[#allocation0] sm:$0x1] %vm9, %v8
    %s11 = scalar_lea.vmem %s0, 14
    %v12 = vld [vmem:[%s11] sm:$0x1]
    %13 = vrot.lane.b32.xlu0 %v12, 112
    %v14 = vpop.permute.xlu0 %13
    %vm15 = vcmask 982912
    %16 = vst.msk [vmem:[#allocation0] sm:$0x1] %vm15, %v14
    %s17 = scalar_lea.vmem %s0, 13
    %v18 = vld [vmem:[%s17] sm:$0x1]
    %19 = vrot.lane.b32.xlu0 %v18, 104
    %v20 = vpop.permute.xlu0 %19
    %vm21 = vcmask 917312
    %22 = vst.msk [vmem:[#allocation0] sm:$0x1] %vm21, %v20
    %s23 = scalar_lea.vmem %s0, 12
    %v24 = vld [vmem:[%s23] sm:$0x1]
    %25 = vrot.lane.b32.xlu0 %v24, 96
    %v26 = vpop.permute.xlu0 %25
    %vm27 = vcmask 851712
    %28 = vst.msk [vmem:[#allocation0] sm:$0x1] %vm27, %v26
    %s29 = scalar_lea.vmem %s0, 11
    %v30 = vld [vmem:[%s29] sm:$0x1]
    %31 = vrot.lane.b32.xlu0 %v30, 88
    %v32 = vpop.permute.xlu0 %31
    %vm33 = vcmask 786112
    %34 = vst.msk [vmem:[#allocation0] sm:$0x1] %vm33, %v32
    %s35 = scalar_lea.vmem %s0, 10
    %v36 = vld [vmem:[%s35] sm:$0x1]
    %37 = vrot.lane.b32.xlu0 %v36, 80
    %v38 = vpop.permute.xlu0 %37
    %vm39 = vcmask 720512
    %40 = vst.msk [vmem:[#allocation0] sm:$0x1] %vm39, %v38
    %s41 = scalar_lea.vmem %s0, 9
    %v42 = vld [vmem:[%s41] sm:$0x1]
    %43 = vrot.lane.b32.xlu0 %v42, 72
    %v44 = vpop.permute.xlu0 %43
    %vm45 = vcmask 654912
    %46 = vst.msk [vmem:[#allocation0] sm:$0x1] %vm45, %v44
    %s47 = scalar_lea.vmem %s0, 8
    %v48 = vld [vmem:[%s47] sm:$0x1]
    %49 = vrot.lane.b32.xlu0 %v48, 64
    %v50 = vpop.permute.xlu0 %49
    %vm51 = vcmask 589312
    %52 = vst.msk [vmem:[#allocation0] sm:$0x1] %vm51, %v50
    %s53 = scalar_lea.vmem %s0, 7
    %v54 = vld [vmem:[%s53] sm:$0x1]
    %55 = vrot.lane.b32.xlu0 %v54, 56
    %v56 = vpop.permute.xlu0 %55
    %vm57 = vcmask 523712
    %58 = vst.msk [vmem:[#allocation0] sm:$0x1] %vm57, %v56
    %s59 = scalar_lea.vmem %s0, 6
    %v60 = vld [vmem:[%s59] sm:$0x1]
    %61 = vrot.lane.b32.xlu0 %v60, 48
    %v62 = vpop.permute.xlu0 %61
    %vm63 = vcmask 458112
    %64 = vst.msk [vmem:[#allocation0] sm:$0x1] %vm63, %v62
    %s65 = scalar_lea.vmem %s0, 5
    %v66 = vld [vmem:[%s65] sm:$0x1]
    %67 = vrot.lane.b32.xlu0 %v66, 40
    %v68 = vpop.permute.xlu0 %67
    %vm69 = vcmask 392512
    %70 = vst.msk [vmem:[#allocation0] sm:$0x1] %vm69, %v68
    %s71 = scalar_lea.vmem %s0, 4
    %v72 = vld [vmem:[%s71] sm:$0x1]
    %73 = vrot.lane.b32.xlu0 %v72, 32
    %v74 = vpop.permute.xlu0 %73
    %vm75 = vcmask 326912
    %76 = vst.msk [vmem:[#allocation0] sm:$0x1] %vm75, %v74
    %s77 = scalar_lea.vmem %s0, 3
    %v78 = vld [vmem:[%s77] sm:$0x1]
    %79 = vrot.lane.b32.xlu0 %v78, 24
    %v80 = vpop.permute.xlu0 %79
    %vm81 = vcmask 261312
    %82 = vst.msk [vmem:[#allocation0] sm:$0x1] %vm81, %v80
    %s83 = scalar_lea.vmem %s0, 2
    %v84 = vld [vmem:[%s83] sm:$0x1]
    %85 = vrot.lane.b32.xlu0 %v84, 16
    %v86 = vpop.permute.xlu0 %85
    %vm87 = vcmask 195712
    %88 = vst.msk [vmem:[#allocation0] sm:$0x1] %vm87, %v86
    %s89 = scalar_lea.vmem %s0, 1
    %v90 = vld [vmem:[%s89] sm:$0x1]
    %91 = vrot.lane.b32.xlu0 %v90, 8
    %v92 = vpop.permute.xlu0 %91
    %vm93 = vcmask 130112
    %94 = vst.msk [vmem:[#allocation0] sm:$0x1] %vm93, %v92
    %s96 = sshllo.u32 0, 1
    %v98 = vld [vmem:[#allocation0] sm:%s96]
    %s99 = sshllo.u32 0, 1
    %100 = vst [vmem:[%s1] sm:%s99] %v98

// kernel: tile.28
$region0: #{tile.28}
  #allocation0 [shape = 's32[1]{0}', space=sflag, size = 0x4, scoped, tag = 'scoped memory for tile.28']
  %s0 = inlined_call_operand.vmem [shape: f32[8], index: 0, kind: input, shape index: {}]
  %s1 = inlined_call_operand.vmem [shape: f32[8,8], index: 1, kind: output, shape index: {}]
  // Predicated region
  $region2: #{tile.28} parent=0 // pred_check
    _
  $region3: #{tile.28} parent=0 // pred_check_branch
    %3 = sbr.rel (0) target = $region5
  $region4: #{tile.28} parent=0 // pred_region
    _
  $region5: #{tile.28} parent=0 // pred_fallthru
    _
  %v4 = vld [vmem:[%s0] ss:$0 sm:$0xff]
  %5 = vst [vmem:[%s1] sm:$0xff] %v4

// kernel: tile.29
$region0: #{tile.29}
  %s0 = inlined_call_operand.vmem [shape: f32[8,8], index: 0, kind: input, shape index: {}]
  %s1 = inlined_call_operand.vmem [shape: f32[1,64], index: 1, kind: output, shape index: {}]
  $region1: #{tile.29} parent=0
    #allocation0 [shape = 'u8[4096]{0}', space=vmem, size = 0x1000, scoped, tag = 'scoped mem for output reshape']
    %v2 = vld [vmem:[%s0] sm:$0x1]
    %vm3 = vcmask 64512
    %4 = vst.msk [vmem:[#allocation0] sm:$0x1] %vm3, %v2
    %s5 = scalar_lea.vmem %s0, 7
    %v6 = vld [vmem:[%s5] sm:$0x1]
    %7 = vrot.lane.b32.xlu0 %v6, 56
    %v8 = vpop.permute.xlu0 %7
    %vm9 = vcmask 523712
    %10 = vst.msk [vmem:[#allocation0] sm:$0x1] %vm9, %v8
    %s11 = scalar_lea.vmem %s0, 6
    %v12 = vld [vmem:[%s11] sm:$0x1]
    %13 = vrot.lane.b32.xlu0 %v12, 48
    %v14 = vpop.permute.xlu0 %13
    %vm15 = vcmask 458112
    %16 = vst.msk [vmem:[#allocation0] sm:$0x1] %vm15, %v14
    %s17 = scalar_lea.vmem %s0, 5
    %v18 = vld [vmem:[%s17] sm:$0x1]
    %19 = vrot.lane.b32.xlu0 %v18, 40
    %v20 = vpop.permute.xlu0 %19
    %vm21 = vcmask 392512
    %22 = vst.msk [vmem:[#allocation0] sm:$0x1] %vm21, %v20
    %s23 = scalar_lea.vmem %s0, 4
    %v24 = vld [vmem:[%s23] sm:$0x1]
    %25 = vrot.lane.b32.xlu0 %v24, 32
    %v26 = vpop.permute.xlu0 %25
    %vm27 = vcmask 326912
    %28 = vst.msk [vmem:[#allocation0] sm:$0x1] %vm27, %v26
    %s29 = scalar_lea.vmem %s0, 3
    %v30 = vld [vmem:[%s29] sm:$0x1]
    %31 = vrot.lane.b32.xlu0 %v30, 24
    %v32 = vpop.permute.xlu0 %31
    %vm33 = vcmask 261312
    %34 = vst.msk [vmem:[#allocation0] sm:$0x1] %vm33, %v32
    %s35 = scalar_lea.vmem %s0, 2
    %v36 = vld [vmem:[%s35] sm:$0x1]
    %37 = vrot.lane.b32.xlu0 %v36, 16
    %v38 = vpop.permute.xlu0 %37
    %vm39 = vcmask 195712
    %40 = vst.msk [vmem:[#allocation0] sm:$0x1] %vm39, %v38
    %s41 = scalar_lea.vmem %s0, 1
    %v42 = vld [vmem:[%s41] sm:$0x1]
    %43 = vrot.lane.b32.xlu0 %v42, 8
    %v44 = vpop.permute.xlu0 %43
    %vm45 = vcmask 130112
    %46 = vst.msk [vmem:[#allocation0] sm:$0x1] %vm45, %v44
    %s48 = sshllo.u32 0, 1
    %v50 = vld [vmem:[#allocation0] sm:%s48]
    %s51 = sshllo.u32 0, 1
    %52 = vst [vmem:[%s1] sm:%s51] %v50

// kernel: bottleneck_forward.1
$region0: #{bottleneck_forward.1}
  #allocation0 [shape = 'u32[]', space=smem, size = 0x4, offset = 0x4, fixed_abs, tag = 'smem constant byte address 0x4 - core index']
  #allocation1 [shape = 'u32[144,128]{1,0:T(1,128)}', space=vmem, size = 0x12000, scoped, tag = 'internal scratch']
  %s0 = inlined_call_operand.vmem [shape: bf16[2,16,256], index: 0, kind: input, shape index: {}]
  %s1 = inlined_call_operand.vmem [shape: bf16[256,144], index: 1, kind: input, shape index: {}]
  %s2 = inlined_call_operand.vmem [shape: bf16[3,144,64], index: 2, kind: input, shape index: {}]
  %s3 = inlined_call_operand.vmem [shape: bf16[64,256], index: 3, kind: input, shape index: {}]
  %s4 = inlined_call_operand.vmem [shape: bf16[256,256], index: 4, kind: input, shape index: {}]
  %s5 = inlined_call_operand.vmem [shape: bf16[3,8,16], index: 5, kind: input, shape index: {}]
  %s6 = inlined_call_operand.vmem [shape: f32[1,144], index: 6, kind: input, shape index: {}]
  %s7 = inlined_call_operand.vmem [shape: f32[1,64], index: 7, kind: input, shape index: {}]
  %s8 = inlined_call_operand.vmem [shape: f32[1,256], index: 8, kind: input, shape index: {}]
  %s9 = inlined_call_operand.vmem [shape: f32[2,8,256], index: 9, kind: output, shape index: {}]
  %s10 = sld [smem:[#allocation0]]
  $region69: #{bottleneck_forward.1} parent=0
    _
  %s12 = ssub.s32 1, %s10
  %s13 = scalar_select 0, %s12, %s10
  loop: start=0, step=1, limit=4
  $region2: #{bottleneck_forward.1} parent=0 // loop_pre_header
    _
  $region3: #{bottleneck_forward.1} parent=0 // loop_header
    %s15 = sphi 0, %s19
    %p16 = scmp.ge.s32.totalorder %s15, 4
    %s25 = sphi 0, %s27
    %s28 = sphi 0, %s25
    %s29 = sphi 0, %s28
    %s45 = sphi 0, %s29
    %s49 = sphi 0, %s49
    %s51 = sphi 0, %s49
    %s52 = sphi 0, %s51
    %s66 = sphi 0, %s52
    %s70 = sphi 0, %s70
    %s72 = sphi 0, %s70
    %s73 = sphi 0, %s72
    %s87 = sphi 0, %s73
    %s91 = sphi 0, %s91
    %s93 = sphi 0, %s91
    %s94 = sphi 0, %s93
    %s108 = sphi 0, %s94
    %s112 = sphi 0, %s112
    %s114 = sphi 0, %s112
    %s115 = sphi 0, %s114
    %s129 = sphi 0, %s115
    %s133 = sphi 0, %s133
    %s135 = sphi 0, %s133
    %s136 = sphi 0, %s135
    %s150 = sphi 0, %s136
    %s154 = sphi 0, %s154
    %s156 = sphi 0, %s154
    %s157 = sphi 0, %s156
    %s171 = sphi 0, %s157
    %s175 = sphi 0, %s175
    %s177 = sphi 0, %s175
    %s178 = sphi 0, %s177
    %s192 = sphi 0, %s178
    %s196 = sphi 0, %s196
    %s198 = sphi 0, %s196
    %s199 = sphi 0, %s198
    %s213 = sphi 0, %s199
    %s219 = sphi 0, %s221
    %s222 = sphi 0, %s219
    %s223 = sphi 0, %s222
    %s239 = sphi 0, %s223
  $region4: #{bottleneck_forward.1} parent=0 // loop_header_branch
    %18 = sbr.rel (%p16) target = $region8
  $region5: #{bottleneck_forward.1} parent=0 // loop_body
    %s20 = ssub.s32 %s15, 1
    %s21 = ssub.s32 %s15, 2
    %s22 = sadd.s32 %s15, 1
    %s23 = ssub.s32 %s15, %s22
    %p24 = scmp.eq.s32.totalorder %s23, 0
    %s26 = sadd.s32 %s25, 1
    %s27 = scalar_select %p24, %s25, %s26
    %p30 = pneg %p24
    %p31 = scmp.eq.s32.totalorder %s15, 1
    %p32 = por %p30, %p31
    %p33 = scmp.ne.s32.totalorder %s25, %s28
    %p34 = scmp.eq.s32.totalorder %s15, 0
    %p35 = por %p33, %p34
    %p36 = scmp.ne.s32.totalorder %s25, %s28
    %p37 = scmp.eq.s32.totalorder %s20, 1
    %p38 = por %p36, %p37
    %p39 = scmp.ne.s32.totalorder %s28, %s29
    %p40 = scmp.eq.s32.totalorder %s20, 0
    %p41 = por %p39, %p40
    %p42 = scmp.ne.s32.totalorder %s28, %s29
    %p43 = scmp.eq.s32.totalorder %s21, 1
    %p44 = por %p42, %p43
    %p46 = scmp.ne.s32.totalorder %s29, %s45
    %p47 = scmp.eq.s32.totalorder %s21, 0
    %p48 = por %p46, %p47
    %s50 = sadd.s32 %s49, 1
    %p53 = scmp.eq.s32.totalorder %s15, 1
    %p54 = scmp.ne.s32.totalorder %s49, %s51
    %p55 = scmp.eq.s32.totalorder %s15, 0
    %p56 = por %p54, %p55
    %p57 = scmp.ne.s32.totalorder %s49, %s51
    %p58 = scmp.eq.s32.totalorder %s20, 1
    %p59 = por %p57, %p58
    %p60 = scmp.ne.s32.totalorder %s51, %s52
    %p61 = scmp.eq.s32.totalorder %s20, 0
    %p62 = por %p60, %p61
    %p63 = scmp.ne.s32.totalorder %s51, %s52
    %p64 = scmp.eq.s32.totalorder %s21, 1
    %p65 = por %p63, %p64
    %p67 = scmp.ne.s32.totalorder %s52, %s66
    %p68 = scmp.eq.s32.totalorder %s21, 0
    %p69 = por %p67, %p68
    %s71 = sadd.s32 %s70, 1
    %p74 = scmp.eq.s32.totalorder %s15, 1
    %p75 = scmp.ne.s32.totalorder %s70, %s72
    %p76 = scmp.eq.s32.totalorder %s15, 0
    %p77 = por %p75, %p76
    %p78 = scmp.ne.s32.totalorder %s70, %s72
    %p79 = scmp.eq.s32.totalorder %s20, 1
    %p80 = por %p78, %p79
    %p81 = scmp.ne.s32.totalorder %s72, %s73
    %p82 = scmp.eq.s32.totalorder %s20, 0
    %p83 = por %p81, %p82
    %p84 = scmp.ne.s32.totalorder %s72, %s73
    %p85 = scmp.eq.s32.totalorder %s21, 1
    %p86 = por %p84, %p85
    %p88 = scmp.ne.s32.totalorder %s73, %s87
    %p89 = scmp.eq.s32.totalorder %s21, 0
    %p90 = por %p88, %p89
    %s92 = sadd.s32 %s91, 1
    %p95 = scmp.eq.s32.totalorder %s15, 1
    %p96 = scmp.ne.s32.totalorder %s91, %s93
    %p97 = scmp.eq.s32.totalorder %s15, 0
    %p98 = por %p96, %p97
    %p99 = scmp.ne.s32.totalorder %s91, %s93
    %p100 = scmp.eq.s32.totalorder %s20, 1
    %p101 = por %p99, %p100
    %p102 = scmp.ne.s32.totalorder %s93, %s94
    %p103 = scmp.eq.s32.totalorder %s20, 0
    %p104 = por %p102, %p103
    %p105 = scmp.ne.s32.totalorder %s93, %s94
    %p106 = scmp.eq.s32.totalorder %s21, 1
    %p107 = por %p105, %p106
    %p109 = scmp.ne.s32.totalorder %s94, %s108
    %p110 = scmp.eq.s32.totalorder %s21, 0
    %p111 = por %p109, %p110
    %s113 = sadd.s32 %s112, 1
    %p116 = scmp.eq.s32.totalorder %s15, 1
    %p117 = scmp.ne.s32.totalorder %s112, %s114
    %p118 = scmp.eq.s32.totalorder %s15, 0
    %p119 = por %p117, %p118
    %p120 = scmp.ne.s32.totalorder %s112, %s114
    %p121 = scmp.eq.s32.totalorder %s20, 1
    %p122 = por %p120, %p121
    %p123 = scmp.ne.s32.totalorder %s114, %s115
    %p124 = scmp.eq.s32.totalorder %s20, 0
    %p125 = por %p123, %p124
    %p126 = scmp.ne.s32.totalorder %s114, %s115
    %p127 = scmp.eq.s32.totalorder %s21, 1
    %p128 = por %p126, %p127
    %p130 = scmp.ne.s32.totalorder %s115, %s129
    %p131 = scmp.eq.s32.totalorder %s21, 0
    %p132 = por %p130, %p131
    %s134 = sadd.s32 %s133, 1
    %p137 = scmp.eq.s32.totalorder %s15, 1
    %p138 = scmp.ne.s32.totalorder %s133, %s135
    %p139 = scmp.eq.s32.totalorder %s15, 0
    %p140 = por %p138, %p139
    %p141 = scmp.ne.s32.totalorder %s133, %s135
    %p142 = scmp.eq.s32.totalorder %s20, 1
    %p143 = por %p141, %p142
    %p144 = scmp.ne.s32.totalorder %s135, %s136
    %p145 = scmp.eq.s32.totalorder %s20, 0
    %p146 = por %p144, %p145
    %p147 = scmp.ne.s32.totalorder %s135, %s136
    %p148 = scmp.eq.s32.totalorder %s21, 1
    %p149 = por %p147, %p148
    %p151 = scmp.ne.s32.totalorder %s136, %s150
    %p152 = scmp.eq.s32.totalorder %s21, 0
    %p153 = por %p151, %p152
    %s155 = sadd.s32 %s154, 1
    %p158 = scmp.eq.s32.totalorder %s15, 1
    %p159 = scmp.ne.s32.totalorder %s154, %s156
    %p160 = scmp.eq.s32.totalorder %s15, 0
    %p161 = por %p159, %p160
    %p162 = scmp.ne.s32.totalorder %s154, %s156
    %p163 = scmp.eq.s32.totalorder %s20, 1
    %p164 = por %p162, %p163
    %p165 = scmp.ne.s32.totalorder %s156, %s157
    %p166 = scmp.eq.s32.totalorder %s20, 0
    %p167 = por %p165, %p166
    %p168 = scmp.ne.s32.totalorder %s156, %s157
    %p169 = scmp.eq.s32.totalorder %s21, 1
    %p170 = por %p168, %p169
    %p172 = scmp.ne.s32.totalorder %s157, %s171
    %p173 = scmp.eq.s32.totalorder %s21, 0
    %p174 = por %p172, %p173
    %s176 = sadd.s32 %s175, 1
    %p179 = scmp.eq.s32.totalorder %s15, 1
    %p180 = scmp.ne.s32.totalorder %s175, %s177
    %p181 = scmp.eq.s32.totalorder %s15, 0
    %p182 = por %p180, %p181
    %p183 = scmp.ne.s32.totalorder %s175, %s177
    %p184 = scmp.eq.s32.totalorder %s20, 1
    %p185 = por %p183, %p184
    %p186 = scmp.ne.s32.totalorder %s177, %s178
    %p187 = scmp.eq.s32.totalorder %s20, 0
    %p188 = por %p186, %p187
    %p189 = scmp.ne.s32.totalorder %s177, %s178
    %p190 = scmp.eq.s32.totalorder %s21, 1
    %p191 = por %p189, %p190
    %p193 = scmp.ne.s32.totalorder %s178, %s192
    %p194 = scmp.eq.s32.totalorder %s21, 0
    %p195 = por %p193, %p194
    %s197 = sadd.s32 %s196, 1
    %p200 = scmp.eq.s32.totalorder %s15, 1
    %p201 = scmp.ne.s32.totalorder %s196, %s198
    %p202 = scmp.eq.s32.totalorder %s15, 0
    %p203 = por %p201, %p202
    %p204 = scmp.ne.s32.totalorder %s196, %s198
    %p205 = scmp.eq.s32.totalorder %s20, 1
    %p206 = por %p204, %p205
    %p207 = scmp.ne.s32.totalorder %s198, %s199
    %p208 = scmp.eq.s32.totalorder %s20, 0
    %p209 = por %p207, %p208
    %p210 = scmp.ne.s32.totalorder %s198, %s199
    %p211 = scmp.eq.s32.totalorder %s21, 1
    %p212 = por %p210, %p211
    %p214 = scmp.ne.s32.totalorder %s199, %s213
    %p215 = scmp.eq.s32.totalorder %s21, 0
    %p216 = por %p214, %p215
    %s217 = ssub.s32 %s15, %s22
    %p218 = scmp.eq.s32.totalorder %s217, 0
    %s220 = sadd.s32 %s219, 1
    %s221 = scalar_select %p218, %s219, %s220
    %p224 = pneg %p218
    %p225 = scmp.eq.s32.totalorder %s15, 1
    %p226 = por %p224, %p225
    %p227 = scmp.ne.s32.totalorder %s219, %s222
    %p228 = scmp.eq.s32.totalorder %s15, 0
    %p229 = por %p227, %p228
    %p230 = scmp.ne.s32.totalorder %s219, %s222
    %p231 = scmp.eq.s32.totalorder %s20, 1
    %p232 = por %p230, %p231
    %p233 = scmp.ne.s32.totalorder %s222, %s223
    %p234 = scmp.eq.s32.totalorder %s20, 0
    %p235 = por %p233, %p234
    %p236 = scmp.ne.s32.totalorder %s222, %s223
    %p237 = scmp.eq.s32.totalorder %s21, 1
    %p238 = por %p236, %p237
    %p240 = scmp.ne.s32.totalorder %s223, %s239
    %p241 = scmp.eq.s32.totalorder %s21, 0
    %p242 = por %p240, %p241
    %p243 = scmp.le.s32.totalorder 1, %s15
    %p244 = scmp.lt.s32.totalorder %s15, 3
    %p245 = pnand %p243, %p244
    %p246 = pneg %p245
    // Predicated region
    $region9: #{bottleneck_forward.1} parent=5 // pred_check
      _
    $region10: #{bottleneck_forward.1} parent=5 // pred_check_branch
      %248 = sbr.rel (%p245) target = $region12
    $region11: #{bottleneck_forward.1} parent=5 // pred_region
      %s249 = ssub.s32 %s15, 1
      // Predicated region
      $region13: #{bottleneck_forward.1} parent=11 // pred_check
        %p250 = pneg %p62
      $region14: #{bottleneck_forward.1} parent=11 // pred_check_branch
        %252 = sbr.rel (%p250) target = $region16
      $region15: #{bottleneck_forward.1} parent=11 // pred_region
        _
      $region16: #{bottleneck_forward.1} parent=11 // pred_fallthru
        _
      // Predicated region
      $region17: #{bottleneck_forward.1} parent=11 // pred_check
        %p253 = pneg %p83
      $region18: #{bottleneck_forward.1} parent=11 // pred_check_branch
        %255 = sbr.rel (%p253) target = $region20
      $region19: #{bottleneck_forward.1} parent=11 // pred_region
        _
      $region20: #{bottleneck_forward.1} parent=11 // pred_fallthru
        _
      // Predicated region
      $region21: #{bottleneck_forward.1} parent=11 // pred_check
        %p256 = pneg %p104
      $region22: #{bottleneck_forward.1} parent=11 // pred_check_branch
        %258 = sbr.rel (%p256) target = $region24
      $region23: #{bottleneck_forward.1} parent=11 // pred_region
        _
      $region24: #{bottleneck_forward.1} parent=11 // pred_fallthru
        _
      // Predicated region
      $region25: #{bottleneck_forward.1} parent=11 // pred_check
        %p259 = pneg %p125
      $region26: #{bottleneck_forward.1} parent=11 // pred_check_branch
        %261 = sbr.rel (%p259) target = $region28
      $region27: #{bottleneck_forward.1} parent=11 // pred_region
        _
      $region28: #{bottleneck_forward.1} parent=11 // pred_fallthru
        _
      // Predicated region
      $region29: #{bottleneck_forward.1} parent=11 // pred_check
        %p262 = pneg %p146
      $region30: #{bottleneck_forward.1} parent=11 // pred_check_branch
        %264 = sbr.rel (%p262) target = $region32
      $region31: #{bottleneck_forward.1} parent=11 // pred_region
        _
      $region32: #{bottleneck_forward.1} parent=11 // pred_fallthru
        _
      // Predicated region
      $region33: #{bottleneck_forward.1} parent=11 // pred_check
        %p265 = pneg %p167
      $region34: #{bottleneck_forward.1} parent=11 // pred_check_branch
        %267 = sbr.rel (%p265) target = $region36
      $region35: #{bottleneck_forward.1} parent=11 // pred_region
        _
      $region36: #{bottleneck_forward.1} parent=11 // pred_fallthru
        _
      // Predicated region
      $region37: #{bottleneck_forward.1} parent=11 // pred_check
        %p268 = pneg %p188
      $region38: #{bottleneck_forward.1} parent=11 // pred_check_branch
        %270 = sbr.rel (%p268) target = $region40
      $region39: #{bottleneck_forward.1} parent=11 // pred_region
        _
      $region40: #{bottleneck_forward.1} parent=11 // pred_fallthru
        _
      // Predicated region
      $region41: #{bottleneck_forward.1} parent=11 // pred_check
        %p271 = pneg %p209
      $region42: #{bottleneck_forward.1} parent=11 // pred_check_branch
        %273 = sbr.rel (%p271) target = $region44
      $region43: #{bottleneck_forward.1} parent=11 // pred_region
        _
      $region44: #{bottleneck_forward.1} parent=11 // pred_fallthru
        _
    $region12: #{bottleneck_forward.1} parent=5 // pred_fallthru
      _
    %p274 = scmp.lt.s32.totalorder %s15, 2
    // Predicated region
    $region45: #{bottleneck_forward.1} parent=5 // pred_check
      %p275 = pneg %p274
    $region46: #{bottleneck_forward.1} parent=5 // pred_check_branch
      %277 = sbr.rel (%p275) target = $region48
    $region47: #{bottleneck_forward.1} parent=5 // pred_region
      // Predicated region
      $region49: #{bottleneck_forward.1} parent=47 // pred_check
        %p278 = pneg %p35
      $region50: #{bottleneck_forward.1} parent=47 // pred_check_branch
        %280 = sbr.rel (%p278) target = $region52
      $region51: #{bottleneck_forward.1} parent=47 // pred_region
        %p281 = scmp.lt.s32.totalorder %s15, 1
        %s282 = scalar_select %p281, %s15, 1
        %s283 = smul.addr %s282, 4
        %s284 = smul.addr %s283, 4
        %s285 = scalar_lea.vmem %s0, %s284
      $region52: #{bottleneck_forward.1} parent=47 // pred_fallthru
        _
    $region48: #{bottleneck_forward.1} parent=5 // pred_fallthru
      _
    %p286 = scmp.le.s32.totalorder 1, %s15
    %p287 = scmp.lt.s32.totalorder %s15, 3
    %p288 = pnand %p286, %p287
    %p289 = pneg %p288
    // Predicated region
    $region53: #{bottleneck_forward.1} parent=5 // pred_check
      _
    $region54: #{bottleneck_forward.1} parent=5 // pred_check_branch
      %291 = sbr.rel (%p288) target = $region56
    $region55: #{bottleneck_forward.1} parent=5 // pred_region
      %s292 = ssub.s32 %s15, 1
      %p293 = scmp.lt.s32.totalorder %s20, 1
      %s294 = scalar_select %p293, %s20, 1
      %s295 = smul.addr %s294, 4
      %s296 = smul.addr %s295, 4
      %s297 = scalar_lea.vmem %s0, %s296
      %p298 = pneg %p41
      %p299 = pneg %p38
      %p300 = pneg %p62
      %p301 = pneg %p59
      %p302 = pneg %p83
      %p303 = pneg %p80
      %p304 = pneg %p104
      %p305 = pneg %p101
      %p306 = pneg %p125
      %p307 = pneg %p122
      %p308 = pneg %p146
      %p309 = pneg %p143
      %p310 = pneg %p167
      %p311 = pneg %p164
      %p312 = pneg %p188
      %p313 = pneg %p185
      %p314 = pneg %p209
      %p315 = pneg %p206
      %p316 = pneg %p235
      %p317 = pneg %p232
      %p318 = scmp.lt.s32.totalorder %s20, 1
      %s319 = scalar_select %p318, %s20, 1
      %s320 = smul.addr %s319, 2
      %s321 = smul.addr %s320, 8
      %s322 = scalar_lea.vmem %s9, %s321
      %p323 = scmp.lt.s32.totalorder %s20, 1
      %s324 = scalar_select %p323, %s20, 1
      %s325 = smul.addr %s324, 4
      %s326 = smul.addr %s325, 4
      %s327 = scalar_lea.vmem %s0, %s326
      %p328 = scmp.lt.s32.totalorder %s20, 1
      %s329 = scalar_select %p328, %s20, 1
      %s330 = smul.addr %s329, 2
      %s331 = smul.addr %s330, 8
      %s332 = scalar_lea.vmem %s9, %s331
      %v334 = vld [vmem:[%s327] sm:$0xff]
      %v335 = vld [vmem:[%s327 + $0x8] sm:$0xff]
      %v336 = vld [vmem:[%s1] sm:$0xff]
      %v337 = vld [vmem:[%s1 + $0x8] sm:$0xff]
      %v338 = vld [vmem:[%s1 + $0x10] sm:$0xff]
      %v339 = vld [vmem:[%s1 + $0x18] sm:$0xff]
      %v340 = vld [vmem:[%s1 + $0x20] sm:$0xff]
      %v341 = vld [vmem:[%s1 + $0x28] sm:$0xff]
      %v342 = vld [vmem:[%s1 + $0x30] sm:$0xff]
      %v343 = vld [vmem:[%s1 + $0x38] sm:$0xff]
      %v344 = vld [vmem:[%s1 + $0x40] sm:$0xff]
      %v345 = vld [vmem:[%s1 + $0x48] sm:$0xff]
      %v346 = vld [vmem:[%s1 + $0x50] sm:$0xff]
      %v347 = vld [vmem:[%s1 + $0x58] sm:$0xff]
      %v348 = vld [vmem:[%s1 + $0x60] sm:$0xff]
      %v349 = vld [vmem:[%s1 + $0x68] sm:$0xff]
      %v350 = vld [vmem:[%s1 + $0x70] sm:$0xff]
      %v351 = vld [vmem:[%s1 + $0x78] sm:$0xff]
      %v352 = vld [vmem:[%s1 + $0x80] sm:$0xff]
      %v353 = vld [vmem:[%s1 + $0x88] sm:$0xff]
      %v354 = vld [vmem:[%s1 + $0x90] sm:$0xff]
      %v355 = vld [vmem:[%s1 + $0x98] sm:$0xff]
      %v356 = vld [vmem:[%s1 + $0xa0] sm:$0xff]
      %v357 = vld [vmem:[%s1 + $0xa8] sm:$0xff]
      %v358 = vld [vmem:[%s1 + $0xb0] sm:$0xff]
      %v359 = vld [vmem:[%s1 + $0xb8] sm:$0xff]
      %v360 = vld [vmem:[%s1 + $0xc0] sm:$0xff]
      %v361 = vld [vmem:[%s1 + $0xc8] sm:$0xff]
      %v362 = vld [vmem:[%s1 + $0xd0] sm:$0xff]
      %v363 = vld [vmem:[%s1 + $0xd8] sm:$0xff]
      %v364 = vld [vmem:[%s1 + $0xe0] sm:$0xff]
      %v365 = vld [vmem:[%s1 + $0xe8] sm:$0xff]
      %v366 = vld [vmem:[%s1 + $0xf0] sm:$0xff]
      %v367 = vld [vmem:[%s1 + $0xf8] sm:$0xff]
      %v368 = vld [vmem:[%s6] sm:$0x3]
      %v370 = vlaneseq
      %v371 = vshrl.u32 %v370, 7
      %v372 = vsub.s32 0, %v371
      %v373 = vrot.slane %v368, %v372
      %v374 = vlaneseq
      %v375 = vshrl.u32 %v374, 7
      %v376 = vsub.s32 1, %v375
      %v377 = vrot.slane %v368, %v376
      %v382 = vunpack.c.l.b16 %v334
      %v383 = vunpack.c.h.b16 %v334
      %v384 = vunpack.c.l.b16 %v335
      %v385 = vunpack.c.h.b16 %v335
      %v386 = vpack.c.b16 %v384, %v382
      %v387 = vpack.c.b16 %v385, %v383
      %v422 = vunpack.c.l.b16 %v336
      %v423 = vunpack.c.h.b16 %v336
      %v424 = vunpack.c.l.b16 %v337
      %v425 = vunpack.c.h.b16 %v337
      %v426 = vunpack.c.l.b16 %v338
      %v427 = vunpack.c.h.b16 %v338
      %v428 = vunpack.c.l.b16 %v339
      %v429 = vunpack.c.h.b16 %v339
      %v430 = vunpack.c.l.b16 %v340
      %v431 = vunpack.c.h.b16 %v340
      %v432 = vunpack.c.l.b16 %v341
      %v433 = vunpack.c.h.b16 %v341
      %v434 = vunpack.c.l.b16 %v342
      %v435 = vunpack.c.h.b16 %v342
      %v436 = vunpack.c.l.b16 %v343
      %v437 = vunpack.c.h.b16 %v343
      %v438 = vunpack.c.l.b16 %v344
      %v439 = vunpack.c.h.b16 %v344
      %v440 = vunpack.c.l.b16 %v345
      %v441 = vunpack.c.h.b16 %v345
      %v442 = vunpack.c.l.b16 %v346
      %v443 = vunpack.c.h.b16 %v346
      %v444 = vunpack.c.l.b16 %v347
      %v445 = vunpack.c.h.b16 %v347
      %v446 = vunpack.c.l.b16 %v348
      %v447 = vunpack.c.h.b16 %v348
      %v448 = vunpack.c.l.b16 %v349
      %v449 = vunpack.c.h.b16 %v349
      %v450 = vunpack.c.l.b16 %v350
      %v451 = vunpack.c.h.b16 %v350
      %v452 = vunpack.c.l.b16 %v351
      %v453 = vunpack.c.h.b16 %v351
      %v454 = vunpack.c.l.b16 %v352
      %v455 = vunpack.c.h.b16 %v352
      %v456 = vunpack.c.l.b16 %v353
      %v457 = vunpack.c.h.b16 %v353
      %v458 = vunpack.c.l.b16 %v354
      %v459 = vunpack.c.h.b16 %v354
      %v460 = vunpack.c.l.b16 %v355
      %v461 = vunpack.c.h.b16 %v355
      %v462 = vunpack.c.l.b16 %v356
      %v463 = vunpack.c.h.b16 %v356
      %v464 = vunpack.c.l.b16 %v357
      %v465 = vunpack.c.h.b16 %v357
      %v466 = vunpack.c.l.b16 %v358
      %v467 = vunpack.c.h.b16 %v358
      %v468 = vunpack.c.l.b16 %v359
      %v469 = vunpack.c.h.b16 %v359
      %v470 = vunpack.c.l.b16 %v360
      %v471 = vunpack.c.h.b16 %v360
      %v472 = vunpack.c.l.b16 %v361
      %v473 = vunpack.c.h.b16 %v361
      %v474 = vunpack.c.l.b16 %v362
      %v475 = vunpack.c.h.b16 %v362
      %v476 = vunpack.c.l.b16 %v363
      %v477 = vunpack.c.h.b16 %v363
      %v478 = vunpack.c.l.b16 %v364
      %v479 = vunpack.c.h.b16 %v364
      %v480 = vunpack.c.l.b16 %v365
      %v481 = vunpack.c.h.b16 %v365
      %v482 = vunpack.c.l.b16 %v366
      %v483 = vunpack.c.h.b16 %v366
      %v484 = vunpack.c.l.b16 %v367
      %v485 = vunpack.c.h.b16 %v367
      %v486 = vpack.c.b16 %v424, %v422
      %v487 = vpack.c.b16 %v425, %v423
      %v488 = vpack.c.b16 %v428, %v426
      %v489 = vpack.c.b16 %v429, %v427
      %v490 = vpack.c.b16 %v432, %v430
      %v491 = vpack.c.b16 %v433, %v431
      %v492 = vpack.c.b16 %v436, %v434
      %v493 = vpack.c.b16 %v437, %v435
      %v494 = vpack.c.b16 %v440, %v438
      %v495 = vpack.c.b16 %v441, %v439
      %v496 = vpack.c.b16 %v444, %v442
      %v497 = vpack.c.b16 %v445, %v443
      %v498 = vpack.c.b16 %v448, %v446
      %v499 = vpack.c.b16 %v449, %v447
      %v500 = vpack.c.b16 %v452, %v450
      %v501 = vpack.c.b16 %v453, %v451
      %v502 = vpack.c.b16 %v456, %v454
      %v503 = vpack.c.b16 %v457, %v455
      %v504 = vpack.c.b16 %v460, %v458
      %v505 = vpack.c.b16 %v461, %v459
      %v506 = vpack.c.b16 %v464, %v462
      %v507 = vpack.c.b16 %v465, %v463
      %v508 = vpack.c.b16 %v468, %v466
      %v509 = vpack.c.b16 %v469, %v467
      %v510 = vpack.c.b16 %v472, %v470
      %v511 = vpack.c.b16 %v473, %v471
      %v512 = vpack.c.b16 %v476, %v474
      %v513 = vpack.c.b16 %v477, %v475
      %v514 = vpack.c.b16 %v480, %v478
      %v515 = vpack.c.b16 %v481, %v479
      %v516 = vpack.c.b16 %v484, %v482
      %v517 = vpack.c.b16 %v485, %v483
      %550 = vmatprep.subr.bf16.mxu0 %v487
      %551 = vmatpush1.bf16.msra.mxu0 %v486
      %552 = vmatprep.subr.bf16.mxu0 %v489
      %553 = vmatpush1.bf16.msra.mxu0 %v488
      %554 = vmatprep.subr.bf16.mxu0 %v491
      %555 = vmatpush1.bf16.msra.mxu0 %v490
      %556 = vmatprep.subr.bf16.mxu0 %v493
      %557 = vmatpush1.bf16.msra.mxu0 %v492
      %558 = vmatprep.subr.bf16.mxu0 %v495
      %559 = vmatpush1.bf16.msra.mxu0 %v494
      %560 = vmatprep.subr.bf16.mxu0 %v497
      %561 = vmatpush1.bf16.msra.mxu0 %v496
      %562 = vmatprep.subr.bf16.mxu0 %v499
      %563 = vmatpush1.bf16.msra.mxu0 %v498
      %564 = vmatprep.subr.bf16.mxu0 %v501
      %565 = vmatpush1.bf16.msra.mxu0 %v500
      %566 = vmatprep.subr.bf16.mxu0 %v503
      %567 = vmatpush1.bf16.msra.mxu0 %v502
      %568 = vmatprep.subr.bf16.mxu0 %v505
      %569 = vmatpush1.bf16.msra.mxu0 %v504
      %570 = vmatprep.subr.bf16.mxu0 %v507
      %571 = vmatpush1.bf16.msra.mxu0 %v506
      %572 = vmatprep.subr.bf16.mxu0 %v509
      %573 = vmatpush1.bf16.msra.mxu0 %v508
      %574 = vmatprep.subr.bf16.mxu0 %v511
      %575 = vmatpush1.bf16.msra.mxu0 %v510
      %576 = vmatprep.subr.bf16.mxu0 %v513
      %577 = vmatpush1.bf16.msra.mxu0 %v512
      %578 = vmatprep.subr.bf16.mxu0 %v515
      %579 = vmatpush1.bf16.msra.mxu0 %v514
      %580 = vmatprep.subr.bf16.mxu0 %v517
      %581 = vmatpush1.bf16.msra.mxu0 %v516
      %582 = vmatprep.mubr.bf16.mxu0 %v387
      %583 = vmatmul.mubr.bf16.gmra.mrb[0].mxu0 %v386
      %v584 = vpop.f32.mrb[0].mxu0
      %v585 = vadd.f32 %v373, %v584
      %v586 = vpop.f32.mrb[0].mxu0
      %v587 = vadd.f32 %v377, %v586
      %v588 = vpop.f32.mrb[0].mxu0
      %v589 = vadd.f32 %v373, %v588
      %v590 = vpop.f32.mrb[0].mxu0
      %v591 = vadd.f32 %v377, %v590
      %592 = vdwg.mxu0
      %v593 = vmax.f32 %v585, 0.0
      %v594 = vmax.f32 %v587, 0.0
      %v595 = vmax.f32 %v589, 0.0
      %v596 = vmax.f32 %v591, 0.0
      %v597 = vpack.c.bf16 %v595, %v593
      %v598 = vpack.c.bf16 %v596, %v594
      %v599 = vld [vmem:[%s5] sm:$0xf]
      %vm600 = vcmask 130048
      %v602 = vsel %vm600, %v599, 0
      %604 = vmatprep.subr.bf16.mxu0 %v598
      %605 = vmatpush1.bf16.msra.mxu0 %v597
      %606 = vmatprep.subr.bf16.mxu0 0
      %607 = vmatpush1.bf16.msra.mxu0 0
      %608 = vmatprep.subr.bf16.mxu0 0
      %609 = vmatpush1.bf16.msra.mxu0 0
      %610 = vmatprep.subr.bf16.mxu0 0
      %611 = vmatpush1.bf16.msra.mxu0 0
      %612 = vmatprep.subr.bf16.mxu0 0
      %613 = vmatpush1.bf16.msra.mxu0 0
      %614 = vmatprep.subr.bf16.mxu0 0
      %615 = vmatpush1.bf16.msra.mxu0 0
      %616 = vmatprep.subr.bf16.mxu0 0
      %617 = vmatpush1.bf16.msra.mxu0 0
      %618 = vmatprep.subr.bf16.mxu0 0
      %619 = vmatpush1.bf16.msra.mxu0 0
      %620 = vmatprep.subr.bf16.mxu0 0
      %621 = vmatpush1.bf16.msra.mxu0 0
      %622 = vmatprep.subr.bf16.mxu0 0
      %623 = vmatpush1.bf16.msra.mxu0 0
      %624 = vmatprep.subr.bf16.mxu0 0
      %625 = vmatpush1.bf16.msra.mxu0 0
      %626 = vmatprep.subr.bf16.mxu0 0
      %627 = vmatpush1.bf16.msra.mxu0 0
      %628 = vmatprep.subr.bf16.mxu0 0
      %629 = vmatpush1.bf16.msra.mxu0 0
      %630 = vmatprep.subr.bf16.mxu0 0
      %631 = vmatpush1.bf16.msra.mxu0 0
      %632 = vmatprep.subr.bf16.mxu0 0
      %633 = vmatpush1.bf16.msra.mxu0 0
      %634 = vmatprep.subr.bf16.mxu0 0
      %635 = vmatpush1.bf16.msra.mxu0 0
      %636 = vmatprep.mubr.bf16.mxu0 0
      %637 = vmatmul.mubr.bf16.gmra.mrb[0].mxu0 %v602
      %v638 = vpop.f32.mrb[0].mxu0
      %v639 = vadd.f32 0.0, %v638
      %v640 = vpop.f32.mrb[0].mxu0
      %v641 = vadd.f32 0.0, %v640
      %v642 = vpop.f32.mrb[0].mxu0
      %v643 = vpop.f32.mrb[0].mxu0
      %644 = vdwg.mxu0
      %v645 = vpack.c.bf16 %v639, %v639
      %v646 = vpack.c.bf16 %v641, %v641
      %v647 = vld [vmem:[%s2] sm:$0xf]
      %v648 = vld [vmem:[%s2 + $0x4] sm:$0xf]
      %v649 = vld [vmem:[%s2 + $0x8] sm:$0xf]
      %v650 = vld [vmem:[%s2 + $0xc] sm:$0xf]
      %v651 = vld [vmem:[%s2 + $0x10] sm:$0xf]
      %v652 = vld [vmem:[%s2 + $0x14] sm:$0xf]
      %v653 = vld [vmem:[%s2 + $0x18] sm:$0xf]
      %v654 = vld [vmem:[%s2 + $0x1c] sm:$0xf]
      %v655 = vld [vmem:[%s2 + $0x20] sm:$0xf]
      %v656 = vld [vmem:[%s2 + $0x24] sm:$0xf]
      %v657 = vld [vmem:[%s2 + $0x28] sm:$0xf]
      %v658 = vld [vmem:[%s2 + $0x2c] sm:$0xf]
      %v659 = vld [vmem:[%s2 + $0x30] sm:$0xf]
      %v660 = vld [vmem:[%s2 + $0x34] sm:$0xf]
      %v661 = vld [vmem:[%s2 + $0x38] sm:$0xf]
      %v662 = vld [vmem:[%s2 + $0x3c] sm:$0xf]
      %v663 = vld [vmem:[%s2 + $0x40] sm:$0xf]
      %v664 = vld [vmem:[%s2 + $0x44] sm:$0xf]
      %s665 = scalar_lea.vmem %s5, 4
      %v666 = vld [vmem:[%s665] sm:$0xf]
      %v668 = vsel %vm600, %v666, 0
      %670 = vmatprep.subr.bf16.mxu0 %v598
      %671 = vmatpush1.bf16.msra.mxu0 %v597
      %672 = vmatprep.subr.bf16.mxu0 0
      %673 = vmatpush1.bf16.msra.mxu0 0
      %674 = vmatprep.subr.bf16.mxu0 0
      %675 = vmatpush1.bf16.msra.mxu0 0
      %676 = vmatprep.subr.bf16.mxu0 0
      %677 = vmatpush1.bf16.msra.mxu0 0
      %678 = vmatprep.subr.bf16.mxu0 0
      %679 = vmatpush1.bf16.msra.mxu0 0
      %680 = vmatprep.subr.bf16.mxu0 0
      %681 = vmatpush1.bf16.msra.mxu0 0
      %682 = vmatprep.subr.bf16.mxu0 0
      %683 = vmatpush1.bf16.msra.mxu0 0
      %684 = vmatprep.subr.bf16.mxu0 0
      %685 = vmatpush1.bf16.msra.mxu0 0
      %686 = vmatprep.subr.bf16.mxu0 0
      %687 = vmatpush1.bf16.msra.mxu0 0
      %688 = vmatprep.subr.bf16.mxu0 0
      %689 = vmatpush1.bf16.msra.mxu0 0
      %690 = vmatprep.subr.bf16.mxu0 0
      %691 = vmatpush1.bf16.msra.mxu0 0
      %692 = vmatprep.subr.bf16.mxu0 0
      %693 = vmatpush1.bf16.msra.mxu0 0
      %694 = vmatprep.subr.bf16.mxu0 0
      %695 = vmatpush1.bf16.msra.mxu0 0
      %696 = vmatprep.subr.bf16.mxu0 0
      %697 = vmatpush1.bf16.msra.mxu0 0
      %698 = vmatprep.subr.bf16.mxu0 0
      %699 = vmatpush1.bf16.msra.mxu0 0
      %700 = vmatprep.subr.bf16.mxu0 0
      %701 = vmatpush1.bf16.msra.mxu0 0
      %702 = vmatprep.mubr.bf16.mxu0 0
      %703 = vmatmul.mubr.bf16.gmra.mrb[0].mxu0 %v668
      %v704 = vpop.f32.mrb[0].mxu0
      %v705 = vadd.f32 0.0, %v704
      %v706 = vpop.f32.mrb[0].mxu0
      %v707 = vadd.f32 0.0, %v706
      %v708 = vpop.f32.mrb[0].mxu0
      %v709 = vpop.f32.mrb[0].mxu0
      %710 = vdwg.mxu0
      %v711 = vpack.c.bf16 %v705, %v705
      %v712 = vpack.c.bf16 %v707, %v707
      %s713 = scalar_lea.vmem %s2, 72
      %v714 = vld [vmem:[%s713] sm:$0xf]
      %v715 = vld [vmem:[%s713 + $0x4] sm:$0xf]
      %v716 = vld [vmem:[%s713 + $0x8] sm:$0xf]
      %v717 = vld [vmem:[%s713 + $0xc] sm:$0xf]
      %v718 = vld [vmem:[%s713 + $0x10] sm:$0xf]
      %v719 = vld [vmem:[%s713 + $0x14] sm:$0xf]
      %v720 = vld [vmem:[%s713 + $0x18] sm:$0xf]
      %v721 = vld [vmem:[%s713 + $0x1c] sm:$0xf]
      %v722 = vld [vmem:[%s713 + $0x20] sm:$0xf]
      %v723 = vld [vmem:[%s713 + $0x24] sm:$0xf]
      %v724 = vld [vmem:[%s713 + $0x28] sm:$0xf]
      %v725 = vld [vmem:[%s713 + $0x2c] sm:$0xf]
      %v726 = vld [vmem:[%s713 + $0x30] sm:$0xf]
      %v727 = vld [vmem:[%s713 + $0x34] sm:$0xf]
      %v728 = vld [vmem:[%s713 + $0x38] sm:$0xf]
      %v729 = vld [vmem:[%s713 + $0x3c] sm:$0xf]
      %v730 = vld [vmem:[%s713 + $0x40] sm:$0xf]
      %v731 = vld [vmem:[%s713 + $0x44] sm:$0xf]
      %v750 = vunpack.c.l.b16 %v714
      %v751 = vunpack.c.l.b16 %v715
      %v752 = vunpack.c.l.b16 %v716
      %v753 = vunpack.c.l.b16 %v717
      %v754 = vunpack.c.l.b16 %v718
      %v755 = vunpack.c.l.b16 %v719
      %v756 = vunpack.c.l.b16 %v720
      %v757 = vunpack.c.l.b16 %v721
      %v758 = vunpack.c.l.b16 %v722
      %v759 = vunpack.c.l.b16 %v723
      %v760 = vunpack.c.l.b16 %v724
      %v761 = vunpack.c.l.b16 %v725
      %v762 = vunpack.c.l.b16 %v726
      %v763 = vunpack.c.l.b16 %v727
      %v764 = vunpack.c.l.b16 %v728
      %v765 = vunpack.c.l.b16 %v729
      %v766 = vunpack.c.l.b16 %v730
      %v767 = vunpack.c.l.b16 %v731
      %v768 = vpack.c.b16 %v751, %v750
      %v769 = vpack.c.b16 %v753, %v752
      %v770 = vpack.c.b16 %v755, %v754
      %v771 = vpack.c.b16 %v757, %v756
      %v772 = vpack.c.b16 %v759, %v758
      %v773 = vpack.c.b16 %v761, %v760
      %v774 = vpack.c.b16 %v763, %v762
      %v775 = vpack.c.b16 %v765, %v764
      %v776 = vpack.c.b16 %v767, %v766
      %v787 = vsel %vm600, %v712, 0
      %789 = vmatprep.subr.bf16.mxu0 0
      %790 = vmatpush1.bf16.msra.mxu0 %v768
      %791 = vmatprep.subr.bf16.mxu0 0
      %792 = vmatpush1.bf16.msra.mxu0 %v769
      %793 = vmatprep.subr.bf16.mxu0 0
      %794 = vmatpush1.bf16.msra.mxu0 %v770
      %795 = vmatprep.subr.bf16.mxu0 0
      %796 = vmatpush1.bf16.msra.mxu0 %v771
      %797 = vmatprep.subr.bf16.mxu0 0
      %798 = vmatpush1.bf16.msra.mxu0 %v772
      %799 = vmatprep.subr.bf16.mxu0 0
      %800 = vmatpush1.bf16.msra.mxu0 %v773
      %801 = vmatprep.subr.bf16.mxu0 0
      %802 = vmatpush1.bf16.msra.mxu0 %v774
      %803 = vmatprep.subr.bf16.mxu0 0
      %804 = vmatpush1.bf16.msra.mxu0 %v775
      %805 = vmatprep.subr.bf16.mxu0 0
      %806 = vmatpush1.bf16.msra.mxu0 %v776
      %807 = vmatprep.subr.bf16.mxu0 0
      %808 = vmatpush1.bf16.msra.mxu0 0
      %809 = vmatprep.subr.bf16.mxu0 0
      %810 = vmatpush1.bf16.msra.mxu0 0
      %811 = vmatprep.subr.bf16.mxu0 0
      %812 = vmatpush1.bf16.msra.mxu0 0
      %813 = vmatprep.subr.bf16.mxu0 0
      %814 = vmatpush1.bf16.msra.mxu0 0
      %815 = vmatprep.subr.bf16.mxu0 0
      %816 = vmatpush1.bf16.msra.mxu0 0
      %817 = vmatprep.subr.bf16.mxu0 0
      %818 = vmatpush1.bf16.msra.mxu0 0
      %819 = vmatprep.subr.bf16.mxu0 0
      %820 = vmatpush1.bf16.msra.mxu0 0
      %821 = vmatprep.mubr.bf16.mxu0 %v787
      %822 = vmatmul.mubr.bf16.gmra.mrb[0].mxu0 %v711
      %v823 = vpop.f32.mrb[0].mxu0
      %v824 = vadd.f32 0.0, %v823
      %v825 = vpop.f32.mrb[0].mxu0
      %v826 = vpop.f32.mrb[0].mxu0
      %v827 = vpop.f32.mrb[0].mxu0
      %828 = vdwg.mxu0
      %v847 = vunpack.c.l.b16 %v647
      %v848 = vunpack.c.l.b16 %v648
      %v849 = vunpack.c.l.b16 %v649
      %v850 = vunpack.c.l.b16 %v650
      %v851 = vunpack.c.l.b16 %v651
      %v852 = vunpack.c.l.b16 %v652
      %v853 = vunpack.c.l.b16 %v653
      %v854 = vunpack.c.l.b16 %v654
      %v855 = vunpack.c.l.b16 %v655
      %v856 = vunpack.c.l.b16 %v656
      %v857 = vunpack.c.l.b16 %v657
      %v858 = vunpack.c.l.b16 %v658
      %v859 = vunpack.c.l.b16 %v659
      %v860 = vunpack.c.l.b16 %v660
      %v861 = vunpack.c.l.b16 %v661
      %v862 = vunpack.c.l.b16 %v662
      %v863 = vunpack.c.l.b16 %v663
      %v864 = vunpack.c.l.b16 %v664
      %v865 = vpack.c.b16 %v848, %v847
      %v866 = vpack.c.b16 %v850, %v849
      %v867 = vpack.c.b16 %v852, %v851
      %v868 = vpack.c.b16 %v854, %v853
      %v869 = vpack.c.b16 %v856, %v855
      %v870 = vpack.c.b16 %v858, %v857
      %v871 = vpack.c.b16 %v860, %v859
      %v872 = vpack.c.b16 %v862, %v861
      %v873 = vpack.c.b16 %v864, %v863
      %v884 = vsel %vm600, %v646, 0
      %886 = vmatprep.subr.bf16.mxu0 0
      %887 = vmatpush1.bf16.msra.mxu0 %v865
      %888 = vmatprep.subr.bf16.mxu0 0
      %889 = vmatpush1.bf16.msra.mxu0 %v866
      %890 = vmatprep.subr.bf16.mxu0 0
      %891 = vmatpush1.bf16.msra.mxu0 %v867
      %892 = vmatprep.subr.bf16.mxu0 0
      %893 = vmatpush1.bf16.msra.mxu0 %v868
      %894 = vmatprep.subr.bf16.mxu0 0
      %895 = vmatpush1.bf16.msra.mxu0 %v869
      %896 = vmatprep.subr.bf16.mxu0 0
      %897 = vmatpush1.bf16.msra.mxu0 %v870
      %898 = vmatprep.subr.bf16.mxu0 0
      %899 = vmatpush1.bf16.msra.mxu0 %v871
      %900 = vmatprep.subr.bf16.mxu0 0
      %901 = vmatpush1.bf16.msra.mxu0 %v872
      %902 = vmatprep.subr.bf16.mxu0 0
      %903 = vmatpush1.bf16.msra.mxu0 %v873
      %904 = vmatprep.subr.bf16.mxu0 0
      %905 = vmatpush1.bf16.msra.mxu0 0
      %906 = vmatprep.subr.bf16.mxu0 0
      %907 = vmatpush1.bf16.msra.mxu0 0
      %908 = vmatprep.subr.bf16.mxu0 0
      %909 = vmatpush1.bf16.msra.mxu0 0
      %910 = vmatprep.subr.bf16.mxu0 0
      %911 = vmatpush1.bf16.msra.mxu0 0
      %912 = vmatprep.subr.bf16.mxu0 0
      %913 = vmatpush1.bf16.msra.mxu0 0
      %914 = vmatprep.subr.bf16.mxu0 0
      %915 = vmatpush1.bf16.msra.mxu0 0
      %916 = vmatprep.subr.bf16.mxu0 0
      %917 = vmatpush1.bf16.msra.mxu0 0
      %918 = vmatprep.mubr.bf16.mxu0 %v884
      %919 = vmatmul.mubr.bf16.gmra.mrb[0].mxu0 %v645
      %v920 = vpop.f32.mrb[0].mxu0
      %v921 = vadd.f32 %v824, %v920
      %v922 = vpop.f32.mrb[0].mxu0
      %v923 = vpop.f32.mrb[0].mxu0
      %v924 = vpop.f32.mrb[0].mxu0
      %925 = vdwg.mxu0
      %s926 = scalar_lea.vmem %s5, 8
      %v927 = vld [vmem:[%s926] sm:$0xf]
      %v929 = vsel %vm600, %v927, 0
      %931 = vmatprep.subr.bf16.mxu0 %v598
      %932 = vmatpush1.bf16.msra.mxu0 %v597
      %933 = vmatprep.subr.bf16.mxu0 0
      %934 = vmatpush1.bf16.msra.mxu0 0
      %935 = vmatprep.subr.bf16.mxu0 0
      %936 = vmatpush1.bf16.msra.mxu0 0
      %937 = vmatprep.subr.bf16.mxu0 0
      %938 = vmatpush1.bf16.msra.mxu0 0
      %939 = vmatprep.subr.bf16.mxu0 0
      %940 = vmatpush1.bf16.msra.mxu0 0
      %941 = vmatprep.subr.bf16.mxu0 0
      %942 = vmatpush1.bf16.msra.mxu0 0
      %943 = vmatprep.subr.bf16.mxu0 0
      %944 = vmatpush1.bf16.msra.mxu0 0
      %945 = vmatprep.subr.bf16.mxu0 0
      %946 = vmatpush1.bf16.msra.mxu0 0
      %947 = vmatprep.subr.bf16.mxu0 0
      %948 = vmatpush1.bf16.msra.mxu0 0
      %949 = vmatprep.subr.bf16.mxu0 0
      %950 = vmatpush1.bf16.msra.mxu0 0
      %951 = vmatprep.subr.bf16.mxu0 0
      %952 = vmatpush1.bf16.msra.mxu0 0
      %953 = vmatprep.subr.bf16.mxu0 0
      %954 = vmatpush1.bf16.msra.mxu0 0
      %955 = vmatprep.subr.bf16.mxu0 0
      %956 = vmatpush1.bf16.msra.mxu0 0
      %957 = vmatprep.subr.bf16.mxu0 0
      %958 = vmatpush1.bf16.msra.mxu0 0
      %959 = vmatprep.subr.bf16.mxu0 0
      %960 = vmatpush1.bf16.msra.mxu0 0
      %961 = vmatprep.subr.bf16.mxu0 0
      %962 = vmatpush1.bf16.msra.mxu0 0
      %963 = vmatprep.mubr.bf16.mxu0 0
      %964 = vmatmul.mubr.bf16.gmra.mrb[0].mxu0 %v929
      %v965 = vpop.f32.mrb[0].mxu0
      %v966 = vadd.f32 0.0, %v965
      %v967 = vpop.f32.mrb[0].mxu0
      %v968 = vadd.f32 0.0, %v967
      %v969 = vpop.f32.mrb[0].mxu0
      %v970 = vpop.f32.mrb[0].mxu0
      %971 = vdwg.mxu0
      %v972 = vpack.c.bf16 %v966, %v966
      %v973 = vpack.c.bf16 %v968, %v968
      %s974 = scalar_lea.vmem %s2, 144
      %v975 = vld [vmem:[%s974] sm:$0xf]
      %v976 = vld [vmem:[%s974 + $0x4] sm:$0xf]
      %v977 = vld [vmem:[%s974 + $0x8] sm:$0xf]
      %v978 = vld [vmem:[%s974 + $0xc] sm:$0xf]
      %v979 = vld [vmem:[%s974 + $0x10] sm:$0xf]
      %v980 = vld [vmem:[%s974 + $0x14] sm:$0xf]
      %v981 = vld [vmem:[%s974 + $0x18] sm:$0xf]
      %v982 = vld [vmem:[%s974 + $0x1c] sm:$0xf]
      %v983 = vld [vmem:[%s974 + $0x20] sm:$0xf]
      %v984 = vld [vmem:[%s974 + $0x24] sm:$0xf]
      %v985 = vld [vmem:[%s974 + $0x28] sm:$0xf]
      %v986 = vld [vmem:[%s974 + $0x2c] sm:$0xf]
      %v987 = vld [vmem:[%s974 + $0x30] sm:$0xf]
      %v988 = vld [vmem:[%s974 + $0x34] sm:$0xf]
      %v989 = vld [vmem:[%s974 + $0x38] sm:$0xf]
      %v990 = vld [vmem:[%s974 + $0x3c] sm:$0xf]
      %v991 = vld [vmem:[%s974 + $0x40] sm:$0xf]
      %v992 = vld [vmem:[%s974 + $0x44] sm:$0xf]
      %v1011 = vunpack.c.l.b16 %v975
      %v1012 = vunpack.c.l.b16 %v976
      %v1013 = vunpack.c.l.b16 %v977
      %v1014 = vunpack.c.l.b16 %v978
      %v1015 = vunpack.c.l.b16 %v979
      %v1016 = vunpack.c.l.b16 %v980
      %v1017 = vunpack.c.l.b16 %v981
      %v1018 = vunpack.c.l.b16 %v982
      %v1019 = vunpack.c.l.b16 %v983
      %v1020 = vunpack.c.l.b16 %v984
      %v1021 = vunpack.c.l.b16 %v985
      %v1022 = vunpack.c.l.b16 %v986
      %v1023 = vunpack.c.l.b16 %v987
      %v1024 = vunpack.c.l.b16 %v988
      %v1025 = vunpack.c.l.b16 %v989
      %v1026 = vunpack.c.l.b16 %v990
      %v1027 = vunpack.c.l.b16 %v991
      %v1028 = vunpack.c.l.b16 %v992
      %v1029 = vpack.c.b16 %v1012, %v1011
      %v1030 = vpack.c.b16 %v1014, %v1013
      %v1031 = vpack.c.b16 %v1016, %v1015
      %v1032 = vpack.c.b16 %v1018, %v1017
      %v1033 = vpack.c.b16 %v1020, %v1019
      %v1034 = vpack.c.b16 %v1022, %v1021
      %v1035 = vpack.c.b16 %v1024, %v1023
      %v1036 = vpack.c.b16 %v1026, %v1025
      %v1037 = vpack.c.b16 %v1028, %v1027
      %v1048 = vsel %vm600, %v973, 0
      %1050 = vmatprep.subr.bf16.mxu0 0
      %1051 = vmatpush1.bf16.msra.mxu0 %v1029
      %1052 = vmatprep.subr.bf16.mxu0 0
      %1053 = vmatpush1.bf16.msra.mxu0 %v1030
      %1054 = vmatprep.subr.bf16.mxu0 0
      %1055 = vmatpush1.bf16.msra.mxu0 %v1031
      %1056 = vmatprep.subr.bf16.mxu0 0
      %1057 = vmatpush1.bf16.msra.mxu0 %v1032
      %1058 = vmatprep.subr.bf16.mxu0 0
      %1059 = vmatpush1.bf16.msra.mxu0 %v1033
      %1060 = vmatprep.subr.bf16.mxu0 0
      %1061 = vmatpush1.bf16.msra.mxu0 %v1034
      %1062 = vmatprep.subr.bf16.mxu0 0
      %1063 = vmatpush1.bf16.msra.mxu0 %v1035
      %1064 = vmatprep.subr.bf16.mxu0 0
      %1065 = vmatpush1.bf16.msra.mxu0 %v1036
      %1066 = vmatprep.subr.bf16.mxu0 0
      %1067 = vmatpush1.bf16.msra.mxu0 %v1037
      %1068 = vmatprep.subr.bf16.mxu0 0
      %1069 = vmatpush1.bf16.msra.mxu0 0
      %1070 = vmatprep.subr.bf16.mxu0 0
      %1071 = vmatpush1.bf16.msra.mxu0 0
      %1072 = vmatprep.subr.bf16.mxu0 0
      %1073 = vmatpush1.bf16.msra.mxu0 0
      %1074 = vmatprep.subr.bf16.mxu0 0
      %1075 = vmatpush1.bf16.msra.mxu0 0
      %1076 = vmatprep.subr.bf16.mxu0 0
      %1077 = vmatpush1.bf16.msra.mxu0 0
      %1078 = vmatprep.subr.bf16.mxu0 0
      %1079 = vmatpush1.bf16.msra.mxu0 0
      %1080 = vmatprep.subr.bf16.mxu0 0
      %1081 = vmatpush1.bf16.msra.mxu0 0
      %1082 = vmatprep.mubr.bf16.mxu0 %v1048
      %1083 = vmatmul.mubr.bf16.gmra.mrb[0].mxu0 %v972
      %v1084 = vpop.f32.mrb[0].mxu0
      %v1085 = vadd.f32 0.0, %v1084
      %v1086 = vpop.f32.mrb[0].mxu0
      %v1087 = vpop.f32.mrb[0].mxu0
      %v1088 = vpop.f32.mrb[0].mxu0
      %1089 = vdwg.mxu0
      %v1090 = vadd.f32 %v921, %v1085
      %v1091 = vld [vmem:[%s7] sm:$0x1]
      %v1093 = vlaneseq
      %v1094 = vshrl.u32 %v1093, 7
      %v1095 = vsub.s32 0, %v1094
      %v1096 = vrot.slane %v1091, %v1095
      %v1098 = vadd.f32 %v1090, %v1096
      %v1099 = vmax.f32 %v1098, 0.0
      %v1100 = vpack.c.bf16 %v1099, %v1099
      %v1101 = vld [vmem:[%s3] sm:$0xff]
      %v1102 = vld [vmem:[%s3 + $0x8] sm:$0xff]
      %v1103 = vld [vmem:[%s3 + $0x10] sm:$0xff]
      %v1104 = vld [vmem:[%s3 + $0x18] sm:$0xff]
      %v1105 = vld [vmem:[%s3 + $0x20] sm:$0xff]
      %v1106 = vld [vmem:[%s3 + $0x28] sm:$0xff]
      %v1107 = vld [vmem:[%s3 + $0x30] sm:$0xff]
      %v1108 = vld [vmem:[%s3 + $0x38] sm:$0xff]
      %1109 = vmatprep.subr.bf16.mxu0 %v387
      %1110 = vmatpush1.bf16.msra.mxu0 %v386
      %1111 = vmatprep.subr.bf16.mxu0 0
      %1112 = vmatpush1.bf16.msra.mxu0 0
      %1113 = vmatprep.subr.bf16.mxu0 0
      %1114 = vmatpush1.bf16.msra.mxu0 0
      %1115 = vmatprep.subr.bf16.mxu0 0
      %1116 = vmatpush1.bf16.msra.mxu0 0
      %1117 = vmatprep.subr.bf16.mxu0 0
      %1118 = vmatpush1.bf16.msra.mxu0 0
      %1119 = vmatprep.subr.bf16.mxu0 0
      %1120 = vmatpush1.bf16.msra.mxu0 0
      %1121 = vmatprep.subr.bf16.mxu0 0
      %1122 = vmatpush1.bf16.msra.mxu0 0
      %1123 = vmatprep.subr.bf16.mxu0 0
      %1124 = vmatpush1.bf16.msra.mxu0 0
      %1125 = vmatprep.subr.bf16.mxu0 0
      %1126 = vmatpush1.bf16.msra.mxu0 0
      %1127 = vmatprep.subr.bf16.mxu0 0
      %1128 = vmatpush1.bf16.msra.mxu0 0
      %1129 = vmatprep.subr.bf16.mxu0 0
      %1130 = vmatpush1.bf16.msra.mxu0 0
      %1131 = vmatprep.subr.bf16.mxu0 0
      %1132 = vmatpush1.bf16.msra.mxu0 0
      %1133 = vmatprep.subr.bf16.mxu0 0
      %1134 = vmatpush1.bf16.msra.mxu0 0
      %1135 = vmatprep.subr.bf16.mxu0 0
      %1136 = vmatpush1.bf16.msra.mxu0 0
      %1137 = vmatprep.subr.bf16.mxu0 0
      %1138 = vmatpush1.bf16.msra.mxu0 0
      %1139 = vmatprep.subr.bf16.mxu0 0
      %1140 = vmatpush1.bf16.msra.mxu0 0
      %1141 = vmatprep.mubr.bf16.mxu0 0
      %1142 = vmatmul.mubr.bf16.gmra.mrb[0].mxu0 %v668
      %v1143 = vpop.f32.mrb[0].mxu0
      %v1144 = vadd.f32 0.0, %v1143
      %v1145 = vpop.f32.mrb[0].mxu0
      %v1146 = vadd.f32 0.0, %v1145
      %v1147 = vpop.f32.mrb[0].mxu0
      %v1148 = vpop.f32.mrb[0].mxu0
      %1149 = vdwg.mxu0
      %v1150 = vpack.c.bf16 %v1144, %v1144
      %v1151 = vpack.c.bf16 %v1146, %v1146
      %v1152 = vld [vmem:[%s4] sm:$0xff]
      %v1153 = vld [vmem:[%s4 + $0x8] sm:$0xff]
      %v1154 = vld [vmem:[%s4 + $0x10] sm:$0xff]
      %v1155 = vld [vmem:[%s4 + $0x18] sm:$0xff]
      %v1156 = vld [vmem:[%s4 + $0x20] sm:$0xff]
      %v1157 = vld [vmem:[%s4 + $0x28] sm:$0xff]
      %v1158 = vld [vmem:[%s4 + $0x30] sm:$0xff]
      %v1159 = vld [vmem:[%s4 + $0x38] sm:$0xff]
      %v1160 = vld [vmem:[%s4 + $0x40] sm:$0xff]
      %v1161 = vld [vmem:[%s4 + $0x48] sm:$0xff]
      %v1162 = vld [vmem:[%s4 + $0x50] sm:$0xff]
      %v1163 = vld [vmem:[%s4 + $0x58] sm:$0xff]
      %v1164 = vld [vmem:[%s4 + $0x60] sm:$0xff]
      %v1165 = vld [vmem:[%s4 + $0x68] sm:$0xff]
      %v1166 = vld [vmem:[%s4 + $0x70] sm:$0xff]
      %v1167 = vld [vmem:[%s4 + $0x78] sm:$0xff]
      %v1168 = vld [vmem:[%s4 + $0x80] sm:$0xff]
      %v1169 = vld [vmem:[%s4 + $0x88] sm:$0xff]
      %v1170 = vld [vmem:[%s4 + $0x90] sm:$0xff]
      %v1171 = vld [vmem:[%s4 + $0x98] sm:$0xff]
      %v1172 = vld [vmem:[%s4 + $0xa0] sm:$0xff]
      %v1173 = vld [vmem:[%s4 + $0xa8] sm:$0xff]
      %v1174 = vld [vmem:[%s4 + $0xb0] sm:$0xff]
      %v1175 = vld [vmem:[%s4 + $0xb8] sm:$0xff]
      %v1176 = vld [vmem:[%s4 + $0xc0] sm:$0xff]
      %v1177 = vld [vmem:[%s4 + $0xc8] sm:$0xff]
      %v1178 = vld [vmem:[%s4 + $0xd0] sm:$0xff]
      %v1179 = vld [vmem:[%s4 + $0xd8] sm:$0xff]
      %v1180 = vld [vmem:[%s4 + $0xe0] sm:$0xff]
      %v1181 = vld [vmem:[%s4 + $0xe8] sm:$0xff]
      %v1182 = vld [vmem:[%s4 + $0xf0] sm:$0xff]
      %v1183 = vld [vmem:[%s4 + $0xf8] sm:$0xff]
      %v1216 = vunpack.c.l.b16 %v1152
      %v1217 = vunpack.c.h.b16 %v1152
      %v1218 = vunpack.c.l.b16 %v1153
      %v1219 = vunpack.c.h.b16 %v1153
      %v1220 = vunpack.c.l.b16 %v1154
      %v1221 = vunpack.c.h.b16 %v1154
      %v1222 = vunpack.c.l.b16 %v1155
      %v1223 = vunpack.c.h.b16 %v1155
      %v1224 = vunpack.c.l.b16 %v1156
      %v1225 = vunpack.c.h.b16 %v1156
      %v1226 = vunpack.c.l.b16 %v1157
      %v1227 = vunpack.c.h.b16 %v1157
      %v1228 = vunpack.c.l.b16 %v1158
      %v1229 = vunpack.c.h.b16 %v1158
      %v1230 = vunpack.c.l.b16 %v1159
      %v1231 = vunpack.c.h.b16 %v1159
      %v1232 = vunpack.c.l.b16 %v1160
      %v1233 = vunpack.c.h.b16 %v1160
      %v1234 = vunpack.c.l.b16 %v1161
      %v1235 = vunpack.c.h.b16 %v1161
      %v1236 = vunpack.c.l.b16 %v1162
      %v1237 = vunpack.c.h.b16 %v1162
      %v1238 = vunpack.c.l.b16 %v1163
      %v1239 = vunpack.c.h.b16 %v1163
      %v1240 = vunpack.c.l.b16 %v1164
      %v1241 = vunpack.c.h.b16 %v1164
      %v1242 = vunpack.c.l.b16 %v1165
      %v1243 = vunpack.c.h.b16 %v1165
      %v1244 = vunpack.c.l.b16 %v1166
      %v1245 = vunpack.c.h.b16 %v1166
      %v1246 = vunpack.c.l.b16 %v1167
      %v1247 = vunpack.c.h.b16 %v1167
      %v1248 = vunpack.c.l.b16 %v1168
      %v1249 = vunpack.c.h.b16 %v1168
      %v1250 = vunpack.c.l.b16 %v1169
      %v1251 = vunpack.c.h.b16 %v1169
      %v1252 = vunpack.c.l.b16 %v1170
      %v1253 = vunpack.c.h.b16 %v1170
      %v1254 = vunpack.c.l.b16 %v1171
      %v1255 = vunpack.c.h.b16 %v1171
      %v1256 = vunpack.c.l.b16 %v1172
      %v1257 = vunpack.c.h.b16 %v1172
      %v1258 = vunpack.c.l.b16 %v1173
      %v1259 = vunpack.c.h.b16 %v1173
      %v1260 = vunpack.c.l.b16 %v1174
      %v1261 = vunpack.c.h.b16 %v1174
      %v1262 = vunpack.c.l.b16 %v1175
      %v1263 = vunpack.c.h.b16 %v1175
      %v1264 = vunpack.c.l.b16 %v1176
      %v1265 = vunpack.c.h.b16 %v1176
      %v1266 = vunpack.c.l.b16 %v1177
      %v1267 = vunpack.c.h.b16 %v1177
      %v1268 = vunpack.c.l.b16 %v1178
      %v1269 = vunpack.c.h.b16 %v1178
      %v1270 = vunpack.c.l.b16 %v1179
      %v1271 = vunpack.c.h.b16 %v1179
      %v1272 = vunpack.c.l.b16 %v1180
      %v1273 = vunpack.c.h.b16 %v1180
      %v1274 = vunpack.c.l.b16 %v1181
      %v1275 = vunpack.c.h.b16 %v1181
      %v1276 = vunpack.c.l.b16 %v1182
      %v1277 = vunpack.c.h.b16 %v1182
      %v1278 = vunpack.c.l.b16 %v1183
      %v1279 = vunpack.c.h.b16 %v1183
      %v1280 = vpack.c.b16 %v1218, %v1216
      %v1281 = vpack.c.b16 %v1219, %v1217
      %v1282 = vpack.c.b16 %v1222, %v1220
      %v1283 = vpack.c.b16 %v1223, %v1221
      %v1284 = vpack.c.b16 %v1226, %v1224
      %v1285 = vpack.c.b16 %v1227, %v1225
      %v1286 = vpack.c.b16 %v1230, %v1228
      %v1287 = vpack.c.b16 %v1231, %v1229
      %v1288 = vpack.c.b16 %v1234, %v1232
      %v1289 = vpack.c.b16 %v1235, %v1233
      %v1290 = vpack.c.b16 %v1238, %v1236
      %v1291 = vpack.c.b16 %v1239, %v1237
      %v1292 = vpack.c.b16 %v1242, %v1240
      %v1293 = vpack.c.b16 %v1243, %v1241
      %v1294 = vpack.c.b16 %v1246, %v1244
      %v1295 = vpack.c.b16 %v1247, %v1245
      %v1296 = vpack.c.b16 %v1250, %v1248
      %v1297 = vpack.c.b16 %v1251, %v1249
      %v1298 = vpack.c.b16 %v1254, %v1252
      %v1299 = vpack.c.b16 %v1255, %v1253
      %v1300 = vpack.c.b16 %v1258, %v1256
      %v1301 = vpack.c.b16 %v1259, %v1257
      %v1302 = vpack.c.b16 %v1262, %v1260
      %v1303 = vpack.c.b16 %v1263, %v1261
      %v1304 = vpack.c.b16 %v1266, %v1264
      %v1305 = vpack.c.b16 %v1267, %v1265
      %v1306 = vpack.c.b16 %v1270, %v1268
      %v1307 = vpack.c.b16 %v1271, %v1269
      %v1308 = vpack.c.b16 %v1274, %v1272
      %v1309 = vpack.c.b16 %v1275, %v1273
      %v1310 = vpack.c.b16 %v1278, %v1276
      %v1311 = vpack.c.b16 %v1279, %v1277
      %1344 = vmatprep.subr.bf16.mxu0 %v1281
      %1345 = vmatpush1.bf16.msra.mxu0 %v1280
      %1346 = vmatprep.subr.bf16.mxu0 %v1283
      %1347 = vmatpush1.bf16.msra.mxu0 %v1282
      %1348 = vmatprep.subr.bf16.mxu0 %v1285
      %1349 = vmatpush1.bf16.msra.mxu0 %v1284
      %1350 = vmatprep.subr.bf16.mxu0 %v1287
      %1351 = vmatpush1.bf16.msra.mxu0 %v1286
      %1352 = vmatprep.subr.bf16.mxu0 %v1289
      %1353 = vmatpush1.bf16.msra.mxu0 %v1288
      %1354 = vmatprep.subr.bf16.mxu0 %v1291
      %1355 = vmatpush1.bf16.msra.mxu0 %v1290
      %1356 = vmatprep.subr.bf16.mxu0 %v1293
      %1357 = vmatpush1.bf16.msra.mxu0 %v1292
      %1358 = vmatprep.subr.bf16.mxu0 %v1295
      %1359 = vmatpush1.bf16.msra.mxu0 %v1294
      %1360 = vmatprep.subr.bf16.mxu0 %v1297
      %1361 = vmatpush1.bf16.msra.mxu0 %v1296
      %1362 = vmatprep.subr.bf16.mxu0 %v1299
      %1363 = vmatpush1.bf16.msra.mxu0 %v1298
      %1364 = vmatprep.subr.bf16.mxu0 %v1301
      %1365 = vmatpush1.bf16.msra.mxu0 %v1300
      %1366 = vmatprep.subr.bf16.mxu0 %v1303
      %1367 = vmatpush1.bf16.msra.mxu0 %v1302
      %1368 = vmatprep.subr.bf16.mxu0 %v1305
      %1369 = vmatpush1.bf16.msra.mxu0 %v1304
      %1370 = vmatprep.subr.bf16.mxu0 %v1307
      %1371 = vmatpush1.bf16.msra.mxu0 %v1306
      %1372 = vmatprep.subr.bf16.mxu0 %v1309
      %1373 = vmatpush1.bf16.msra.mxu0 %v1308
      %1374 = vmatprep.subr.bf16.mxu0 %v1311
      %1375 = vmatpush1.bf16.msra.mxu0 %v1310
      %1376 = vmatprep.mubr.bf16.mxu0 %v1151
      %1377 = vmatmul.mubr.bf16.gmra.mrb[0].mxu0 %v1150
      %v1378 = vpop.f32.mrb[0].mxu0
      %v1379 = vadd.f32 0.0, %v1378
      %v1380 = vpop.f32.mrb[0].mxu0
      %v1381 = vadd.f32 0.0, %v1380
      %v1382 = vpop.f32.mrb[0].mxu0
      %v1383 = vpop.f32.mrb[0].mxu0
      %1384 = vdwg.mxu0
      %v1393 = vunpack.c.l.b16 %v1101
      %v1394 = vunpack.c.h.b16 %v1101
      %v1395 = vunpack.c.l.b16 %v1102
      %v1396 = vunpack.c.h.b16 %v1102
      %v1397 = vunpack.c.l.b16 %v1103
      %v1398 = vunpack.c.h.b16 %v1103
      %v1399 = vunpack.c.l.b16 %v1104
      %v1400 = vunpack.c.h.b16 %v1104
      %v1401 = vunpack.c.l.b16 %v1105
      %v1402 = vunpack.c.h.b16 %v1105
      %v1403 = vunpack.c.l.b16 %v1106
      %v1404 = vunpack.c.h.b16 %v1106
      %v1405 = vunpack.c.l.b16 %v1107
      %v1406 = vunpack.c.h.b16 %v1107
      %v1407 = vunpack.c.l.b16 %v1108
      %v1408 = vunpack.c.h.b16 %v1108
      %v1409 = vpack.c.b16 %v1395, %v1393
      %v1410 = vpack.c.b16 %v1396, %v1394
      %v1411 = vpack.c.b16 %v1399, %v1397
      %v1412 = vpack.c.b16 %v1400, %v1398
      %v1413 = vpack.c.b16 %v1403, %v1401
      %v1414 = vpack.c.b16 %v1404, %v1402
      %v1415 = vpack.c.b16 %v1407, %v1405
      %v1416 = vpack.c.b16 %v1408, %v1406
      %vm1425 = vcmask 523264
      %v1427 = vsel %vm1425, %v1100, 0
      %1429 = vmatprep.subr.bf16.mxu0 %v1410
      %1430 = vmatpush1.bf16.msra.mxu0 %v1409
      %1431 = vmatprep.subr.bf16.mxu0 %v1412
      %1432 = vmatpush1.bf16.msra.mxu0 %v1411
      %1433 = vmatprep.subr.bf16.mxu0 %v1414
      %1434 = vmatpush1.bf16.msra.mxu0 %v1413
      %1435 = vmatprep.subr.bf16.mxu0 %v1416
      %1436 = vmatpush1.bf16.msra.mxu0 %v1415
      %1437 = vmatprep.subr.bf16.mxu0 0
      %1438 = vmatpush1.bf16.msra.mxu0 0
      %1439 = vmatprep.subr.bf16.mxu0 0
      %1440 = vmatpush1.bf16.msra.mxu0 0
      %1441 = vmatprep.subr.bf16.mxu0 0
      %1442 = vmatpush1.bf16.msra.mxu0 0
      %1443 = vmatprep.subr.bf16.mxu0 0
      %1444 = vmatpush1.bf16.msra.mxu0 0
      %1445 = vmatprep.subr.bf16.mxu0 0
      %1446 = vmatpush1.bf16.msra.mxu0 0
      %1447 = vmatprep.subr.bf16.mxu0 0
      %1448 = vmatpush1.bf16.msra.mxu0 0
      %1449 = vmatprep.subr.bf16.mxu0 0
      %1450 = vmatpush1.bf16.msra.mxu0 0
      %1451 = vmatprep.subr.bf16.mxu0 0
      %1452 = vmatpush1.bf16.msra.mxu0 0
      %1453 = vmatprep.subr.bf16.mxu0 0
      %1454 = vmatpush1.bf16.msra.mxu0 0
      %1455 = vmatprep.subr.bf16.mxu0 0
      %1456 = vmatpush1.bf16.msra.mxu0 0
      %1457 = vmatprep.subr.bf16.mxu0 0
      %1458 = vmatpush1.bf16.msra.mxu0 0
      %1459 = vmatprep.subr.bf16.mxu0 0
      %1460 = vmatpush1.bf16.msra.mxu0 0
      %1461 = vmatprep.mubr.bf16.mxu0 0
      %1462 = vmatmul.mubr.bf16.gmra.mrb[0].mxu0 %v1427
      %v1463 = vpop.f32.mrb[0].mxu0
      %v1464 = vadd.f32 %v1379, %v1463
      %v1465 = vpop.f32.mrb[0].mxu0
      %v1466 = vadd.f32 %v1381, %v1465
      %v1467 = vpop.f32.mrb[0].mxu0
      %v1468 = vpop.f32.mrb[0].mxu0
      %1469 = vdwg.mxu0
      %v1470 = vld [vmem:[%s8] sm:$0x3]
      %v1472 = vlaneseq
      %v1473 = vshrl.u32 %v1472, 7
      %v1474 = vsub.s32 0, %v1473
      %v1475 = vrot.slane %v1470, %v1474
      %v1476 = vlaneseq
      %v1477 = vshrl.u32 %v1476, 7
      %v1478 = vsub.s32 1, %v1477
      %v1479 = vrot.slane %v1470, %v1478
      %v1482 = vadd.f32 %v1464, %v1475
      %v1483 = vadd.f32 %v1466, %v1479
      %v1484 = vmax.f32 %v1482, 0.0
      %v1485 = vmax.f32 %v1483, 0.0
      %1486 = vst [vmem:[%s332] sm:$0xff] %v1484
      %1487 = vst [vmem:[%s332 + $0x8] sm:$0xff] %v1485
      %p1488 = scmp.lt.s32.totalorder %s20, 1
      %s1489 = scalar_select %p1488, %s20, 1
      %s1490 = smul.addr %s1489, 2
      %s1491 = smul.addr %s1490, 8
      %s1492 = scalar_lea.vmem %s9, %s1491
      // Predicated region
      $region57: #{bottleneck_forward.1} parent=55 // pred_check
        %p1493 = pneg %p232
      $region58: #{bottleneck_forward.1} parent=55 // pred_check_branch
        %1495 = sbr.rel (%p1493) target = $region60
      $region59: #{bottleneck_forward.1} parent=55 // pred_region
        _
      $region60: #{bottleneck_forward.1} parent=55 // pred_fallthru
        _
    $region56: #{bottleneck_forward.1} parent=5 // pred_fallthru
      _
    %p1496 = scmp.le.s32.totalorder 2, %s15
    // Predicated region
    $region61: #{bottleneck_forward.1} parent=5 // pred_check
      %p1497 = pneg %p1496
    $region62: #{bottleneck_forward.1} parent=5 // pred_check_branch
      %1499 = sbr.rel (%p1497) target = $region64
    $region63: #{bottleneck_forward.1} parent=5 // pred_region
      %s1500 = ssub.s32 %s15, 2
      // Predicated region
      $region65: #{bottleneck_forward.1} parent=63 // pred_check
        %p1501 = pneg %p238
      $region66: #{bottleneck_forward.1} parent=63 // pred_check_branch
        %1503 = sbr.rel (%p1501) target = $region68
      $region67: #{bottleneck_forward.1} parent=63 // pred_region
        %p1504 = scmp.lt.s32.totalorder %s21, 1
        %s1505 = scalar_select %p1504, %s21, 1
        %s1506 = smul.addr %s1505, 2
        %s1507 = smul.addr %s1506, 8
        %s1508 = scalar_lea.vmem %s9, %s1507
      $region68: #{bottleneck_forward.1} parent=63 // pred_fallthru
        _
    $region64: #{bottleneck_forward.1} parent=5 // pred_fallthru
      _
  $region6: #{bottleneck_forward.1} parent=0 // loop_footer
    %s19 = sadd.s32 1, %s15
  $region7: #{bottleneck_forward.1} parent=0 // loop_footer_branch
    %14 = sbr.rel target = $region3
  $region8: #{bottleneck_forward.1} parent=0 // loop_exit
    _

</llo_original>
